<compile_context>
chip_gen: v6e
topology: v6e:2x2x1
jax: 0.10.0
libtpu: 0.0.40
codegen_flags: <defaults>
</compile_context>

<pallas_src>
import functools
from collections import namedtuple

import jax
import jax.numpy as jnp
from jax.experimental import pallas as pl
from jax.experimental.pallas import tpu as pltpu


@functools.lru_cache(maxsize=None)
def _tco_cap():
    """Output-channel tile width: 256 on 256-wide MXUs (v6e/v7x), 128 on <=v5."""
    try:
        kind = jax.devices()[0].device_kind.lower()
    except Exception:
        return 256
    if any(g in kind for g in ("v2", "v3", "v4", "v5")):
        return 128
    return 256


# ----------------------------------------------------------------------------
# Shared epilogue: f32 bias + ReLU, store, optional fused 2x2/2 maxpool.
# ----------------------------------------------------------------------------
def _bias_relu_pool(acc_ref, b_ref, o_ref, p_ref, rows, W):
    # acc_ref: (rows*W, tco) f32, b_ref: (1, tco) f32, o_ref: (rows*W, tco)
    # p_ref:   ((rows//2)*(W//2), tco) or None
    y = jnp.maximum(acc_ref[...] + b_ref[...], 0.0)                    # f32
    o_ref[...] = y.astype(o_ref.dtype)
    if p_ref is not None:
        co = y.shape[-1]
        Wo = W // 2
        # Vertical max: rows (2r, 2r+1) become contiguous halves of a 2W-wide row.
        yv = y.reshape(rows // 2, 2 * W, co)
        v = jnp.maximum(yv[:, :W, :], yv[:, W:, :])                    # (rows//2, W, co)
        # Horizontal max: columns (2k, 2k+1) become a size-2 middle axis.
        vf = v.reshape((rows // 2) * Wo, 2, co)
        p_ref[...] = jnp.maximum(vf[:, 0, :], vf[:, 1, :]).astype(p_ref.dtype)


# ----------------------------------------------------------------------------
# Conv3x3 (stride 1, pad 1) + bias + ReLU (+ optional fused maxpool) kernels.
# dx is pre-folded into the contraction: K = 3*Cin, 3 matmuls (one per dy).
# ----------------------------------------------------------------------------
def _conv_kernel_sliced(x_ref, w_ref, b_ref, o_ref, *rest, H, W, pool):
    # One image per block; dy resolved by an aligned static slice (W % 16 == 0).
    # x_ref : ((H+2)*W, 3*Cin) bf16   -- haloed, dx-concatenated, flattened input
    # w_ref : (3, 3*Cin, tco)  bf16   -- per-dy weight slabs
    # b_ref : (1, tco)         f32
    # o_ref : (H*W, tco)              -- ReLU output
    # p_ref : ((H//2)*(W//2), tco)    -- pooled output (only when pool=True)
    # acc   : (H*W, tco) f32 VMEM scratch
    if pool:
        p_ref, acc_ref = rest
    else:
        p_ref = None
        (acc_ref,) = rest
    hw = H * W
    acc_ref[...] = jnp.dot(x_ref[pl.ds(0, hw), :], w_ref[0],
                           preferred_element_type=jnp.float32)
    acc_ref[...] += jnp.dot(x_ref[pl.ds(W, hw), :], w_ref[1],
                            preferred_element_type=jnp.float32)
    acc_ref[...] += jnp.dot(x_ref[pl.ds(2 * W, hw), :], w_ref[2],
                            preferred_element_type=jnp.float32)
    _bias_relu_pool(acc_ref, b_ref, o_ref, p_ref, H, W)


def _conv_kernel_folded(x_ref, w_ref, b_ref, o_ref, *rest, rows, W, pool):
    # Batch folded into M; dy is a leading axis (always aligned, zero-cost index).
    # x_ref : (3, N*H*W, 3*Cin) bf16
    # w_ref : (3, 3*Cin, tco)   bf16
    # o_ref : (N*H*W, tco); p_ref : (N*(H//2)*(W//2), tco); acc : (N*H*W, tco) f32
    if pool:
        p_ref, acc_ref = rest
    else:
        p_ref = None
        (acc_ref,) = rest
    acc_ref[...] = jnp.dot(x_ref[0], w_ref[0], preferred_element_type=jnp.float32)
    acc_ref[...] += jnp.dot(x_ref[1], w_ref[1], preferred_element_type=jnp.float32)
    acc_ref[...] += jnp.dot(x_ref[2], w_ref[2], preferred_element_type=jnp.float32)
    _bias_relu_pool(acc_ref, b_ref, o_ref, p_ref, rows, W)


def conv3x3_relu(x_nhwc, w, b, *, pool=False, out_dtype=jnp.bfloat16):
    """x_nhwc: (N,H,W,Cin), w: (9,Cin,Cout) [taps dy*3+dx], b: (1,Cout) or (Cout,).

    Returns (N,H,W,Cout)[out_dtype] and, if pool=True, also the 2x2-maxpooled
    (N,H//2,W//2,Cout) in bf16.
    """
    N, H, W, Cin = x_nhwc.shape
    Cout = w.shape[2]
    if pool:
        assert H % 2 == 0 and W % 2 == 0, "fused 2x2 maxpool needs even H and W"
    cap = _tco_cap()
    tco = min(cap, Cout)

    # Pad tiny channel counts (conv1_1 has Cin=3) up to 8; zero channels contribute 0.
    pad_c = (-Cin) % 8
    if pad_c:
        x_nhwc = jnp.pad(x_nhwc, ((0, 0), (0, 0), (0, 0), (0, pad_c)))
        w = jnp.pad(w, ((0, 0), (0, pad_c), (0, 0)))
    cin_p = Cin + pad_c
    K = 3 * cin_p

    # Single fused XLA pass: halo pad + dx-concat on the lane axis + bf16 cast.
    xp = jnp.pad(x_nhwc, ((0, 0), (1, 1), (1, 1), (0, 0)))                  # (N,H+2,W+2,Cp)
    xs = jnp.concatenate([xp[:, :, dx:dx + W, :] for dx in range(3)], -1)   # (N,H+2,W,3Cp)
    xs = xs.astype(jnp.bfloat16)
    # (9, Cp, Cout) -> (3, 3*Cp, Cout): per-dy slab, lane index = dx*Cp + c.
    w3 = w.astype(jnp.bfloat16).reshape(3, K, Cout)
    b = b.astype(jnp.float32).reshape(1, Cout)

    hw = H * W
    Ho, Wo = H // 2, W // 2
    sliced = (W % 16 == 0)      # dy*W is bf16-sublane aligned -> cheap static slice

    if sliced:
        xs_in = xs.reshape(N, (H + 2) * W, K)
        grid = (Cout // tco, N)  # batch innermost: weight block stays VMEM-resident
        in_specs = [
            pl.BlockSpec((None, (H + 2) * W, K), lambda j, n: (n, 0, 0)),
            pl.BlockSpec((3, K, tco), lambda j, n: (0, 0, j)),
            pl.BlockSpec((1, tco), lambda j, n: (0, j)),
        ]
        out_shapes = [jax.ShapeDtypeStruct((N, hw, Cout), out_dtype)]
        out_specs = [pl.BlockSpec((None, hw, tco), lambda j, n: (n, 0, j))]
        if pool:
            out_shapes.append(jax.ShapeDtypeStruct((N, Ho * Wo, Cout), jnp.bfloat16))
            out_specs.append(pl.BlockSpec((None, Ho * Wo, tco), lambda j, n: (n, 0, j)))
        kernel = functools.partial(_conv_kernel_sliced, H=H, W=W, pool=pool)
        scratch = [pltpu.VMEM((hw, tco), jnp.float32)]
        semantics = ("parallel", "parallel")
    else:
        # Per-dy materialized copies; batch folded into the matmul M dimension.
        xs_in = jnp.stack([xs[:, dy:dy + H] for dy in range(3)], axis=0)
        xs_in = xs_in.reshape(3, N * hw, K)
        # Keep >= 2 grid programs so both TensorCores (v7x) get work.
        if Cout // tco < 2 and tco > 128:
            tco //= 2
        grid = (Cout // tco,)
        in_specs = [
            pl.BlockSpec((3, N * hw, K), lambda j: (0, 0, 0)),
            pl.BlockSpec((3, K, tco), lambda j: (0, 0, j)),
            pl.BlockSpec((1, tco), lambda j: (0, j)),
        ]
        out_shapes = [jax.ShapeDtypeStruct((N * hw, Cout), out_dtype)]
        out_specs = [pl.BlockSpec((N * hw, tco), lambda j: (0, j))]
        if pool:
            out_shapes.append(jax.ShapeDtypeStruct((N * Ho * Wo, Cout), jnp.bfloat16))
            out_specs.append(pl.BlockSpec((N * Ho * Wo, tco), lambda j: (0, j)))
        kernel = functools.partial(_conv_kernel_folded, rows=N * H, W=W, pool=pool)
        scratch = [pltpu.VMEM((N * hw, tco), jnp.float32)]
        semantics = ("parallel",)

    assert Cout % tco == 0

    cost = pl.CostEstimate(
        flops=2 * N * hw * 9 * Cin * Cout,
        transcendentals=0,
        bytes_accessed=int(xs_in.size) * 2 + int(w3.size) * 2 + Cout * 4
        + N * hw * Cout * jnp.dtype(out_dtype).itemsize
        + (N * Ho * Wo * Cout * 2 if pool else 0),
    )

    outs = pl.pallas_call(
        kernel,
        out_shape=tuple(out_shapes),
        grid_spec=pltpu.PrefetchScalarGridSpec(
            num_scalar_prefetch=0,
            grid=grid,
            in_specs=in_specs,
            out_specs=tuple(out_specs),
            scratch_shapes=scratch,
        ),
        compiler_params=pltpu.CompilerParams(dimension_semantics=semantics),
        cost_estimate=cost,
    )(xs_in, w3, b)

    o = outs[0].reshape(N, H, W, Cout)
    if pool:
        return o, outs[1].reshape(N, Ho, Wo, Cout)
    return o


# ----------------------------------------------------------------------------
# VGG16 parameters (deterministic synthetic init; shapes match torchvision).
# ----------------------------------------------------------------------------
VGG16_CONVS = [
    ("conv1_1", 3, 64), ("conv1_2", 64, 64),
    ("conv2_1", 64, 128), ("conv2_2", 128, 128),
    ("conv3_1", 128, 256), ("conv3_2", 256, 256), ("conv3_3", 256, 256),
    ("conv4_1", 256, 512), ("conv4_2", 512, 512), ("conv4_3", 512, 512),
    ("conv5_1", 512, 512), ("conv5_2", 512, 512), ("conv5_3", 512, 512),
]


def init_vgg16_params(key):
    params = {}
    for name, cin, cout in VGG16_CONVS:
        key, kw = jax.random.split(key)
        # PyTorch weight layout (Cout, Cin, 3, 3) -> kernel layout (9, Cin, Cout),
        # taps ordered kh*3+kw (cross-correlation, like torch.nn.Conv2d).
        w_oihw = jax.random.normal(kw, (cout, cin, 3, 3), jnp.float32)
        w_oihw = w_oihw * jnp.sqrt(2.0 / (9.0 * cin))
        w = jnp.transpose(w_oihw, (2, 3, 1, 0)).reshape(9, cin, cout)
        params[name] = (w.astype(jnp.bfloat16), jnp.zeros((1, cout), jnp.float32))
    return params


VggOutputs = namedtuple("VggOutputs",
                        ["relu1_2", "relu2_2", "relu3_3", "relu4_3", "relu5_3"])


def vgg16_forward(params, x_nchw, *, feature_dtype=jnp.float32):
    """feature_dtype=jnp.bfloat16 halves feature writeback bytes (perf option)."""
    x = jnp.transpose(x_nchw, (0, 2, 3, 1)).astype(jnp.float32)     # NCHW -> NHWC

    def conv(name, h, *, pool=False, feature=False):
        w, b = params[name]
        return conv3x3_relu(h, w, b, pool=pool,
                            out_dtype=feature_dtype if feature else jnp.bfloat16)

    h = conv("conv1_1", x)
    relu1_2, h = conv("conv1_2", h, pool=True, feature=True)

    h = conv("conv2_1", h)
    relu2_2, h = conv("conv2_2", h, pool=True, feature=True)

    h = conv("conv3_1", h)
    h = conv("conv3_2", h)
    relu3_3, h = conv("conv3_3", h, pool=True, feature=True)

    h = conv("conv4_1", h)
    h = conv("conv4_2", h)
    relu4_3, h = conv("conv4_3", h, pool=True, feature=True)

    h = conv("conv5_1", h)
    h = conv("conv5_2", h)
    relu5_3 = conv("conv5_3", h, feature=True)

    to_nchw = lambda a: jnp.transpose(a, (0, 3, 1, 2))               # back to PyTorch layout
    return VggOutputs(*(to_nchw(t) for t in
                        (relu1_2, relu2_2, relu3_3, relu4_3, relu5_3)))


# ----------------------------------------------------------------------------
# Deterministic exact self-check: a single off-center identity tap makes the
# bf16 matmul path bit-exact, so conv indexing + fused pooling are verified
# on both the sliced (W%16==0) and folded (small W) layouts.
# ----------------------------------------------------------------------------
def _self_check():
    cases = (
        (2, 16, 16, 8, 16),   # sliced layout
        (2, 8, 8, 8, 16),     # folded layout
        (1, 4, 4, 3, 8),      # folded layout + Cin padding
    )
    for (N, H, W, C, Cout) in cases:
        x = jax.random.normal(jax.random.PRNGKey(1), (N, H, W, C), jnp.float32)
        # Only tap (dy=0, dx=1) is a (truncated) channel identity:
        #   out[:, y, x, c] = relu(x[:, y-1, x, c])  (zero at y == 0), exactly.
        w = jnp.zeros((9, C, Cout), jnp.float32).at[1].set(jnp.eye(C, Cout))
        b = jnp.zeros((1, Cout), jnp.float32)
        out, pooled = conv3x3_relu(x, w, b, pool=True, out_dtype=jnp.float32)

        xb = x.astype(jnp.bfloat16).astype(jnp.float32)              # kernel sees bf16 inputs
        shifted = jnp.pad(xb, ((0, 0), (1, 0), (0, 0), (0, 0)))[:, :H]
        ref = jnp.maximum(shifted, 0.0)
        ref = jnp.concatenate(
            [ref, jnp.zeros((N, H, W, Cout - C), jnp.float32)], axis=-1)
        assert jnp.allclose(out, ref, atol=1e-6), "conv3x3_relu mismatch"

        pref = jnp.max(ref.reshape(N, H // 2, 2, W // 2, 2, Cout), axis=(2, 4))
        pref = pref.astype(jnp.bfloat16).astype(jnp.float32)
        assert jnp.allclose(pooled.astype(jnp.float32), pref, atol=1e-6), \
            "fused maxpool mismatch"


if __name__ == "__main__":
    _self_check()

    key = jax.random.PRNGKey(0)
    kx, kp = jax.random.split(key)
    # Small input consistent with the module: NCHW, 3 input channels, spatial 32
    # survives the 4 maxpools (32 -> 16 -> 8 -> 4 -> 2).
    x = jax.random.normal(kx, (2, 3, 32, 32), jnp.float32)
    params = init_vgg16_params(kp)

    fwd = jax.jit(vgg16_forward)
    out = fwd(params, x)
    jax.block_until_ready(out)

    assert out.relu1_2.shape == (2, 64, 32, 32)
    assert out.relu2_2.shape == (2, 128, 16, 16)
    assert out.relu3_3.shape == (2, 256, 8, 8)
    assert out.relu4_3.shape == (2, 512, 4, 4)
    assert out.relu5_3.shape == (2, 512, 2, 2)
    assert all(bool(jnp.isfinite(t).all()) for t in out)
    print("KERNEL_OK")
</pallas_src>

<mosaic_0001>
module attributes {stable_mosaic.version = 11 : i64} {
  func.func @_conv_kernel_sliced(%arg0: i32, %arg1: i32, %arg2: memref<1x288x24xbf16, #tpu.memory_space<vmem>>, %arg3: memref<3x24x16xbf16, #tpu.memory_space<vmem>>, %arg4: memref<1x16xf32, #tpu.memory_space<vmem>>, %arg5: memref<1x256x16xf32, #tpu.memory_space<vmem>>, %arg6: memref<1x64x16xbf16, #tpu.memory_space<vmem>>, %arg7: memref<256x16xf32, #tpu.memory_space<vmem>>) attributes {dimension_semantics = [#tpu.dimension_semantics<parallel>, #tpu.dimension_semantics<parallel>], iteration_bounds = array<i64: 1, 2>, scalar_prefetch = 0 : i64, scratch_operands = 1 : i64, tpu.core_type = #tpu.core_type<tc>, window_params = [{transform_indices = @transform_0, window_bounds = array<i64: 1, 288, 24>}, {transform_indices = @transform_1, window_bounds = array<i64: 3, 24, 16>}, {transform_indices = @transform_2, window_bounds = array<i64: 1, 16>}, {transform_indices = @transform_3, window_bounds = array<i64: 1, 256, 16>}, {transform_indices = @transform_4, window_bounds = array<i64: 1, 64, 16>}]} {
    %c0 = arith.constant 0 : index
    %c0_0 = arith.constant 0 : index
    %c0_1 = arith.constant 0 : index
    %0 = vector.load %arg2[%c0, %c0_0, %c0_1] : memref<1x288x24xbf16, #tpu.memory_space<vmem>>, vector<1x256x24xbf16>
    %1 = vector.shape_cast %0 : vector<1x256x24xbf16> to vector<256x24xbf16>
    %c0_2 = arith.constant 0 : index
    %c0_3 = arith.constant 0 : index
    %c0_4 = arith.constant 0 : index
    %2 = vector.load %arg3[%c0_2, %c0_3, %c0_4] : memref<3x24x16xbf16, #tpu.memory_space<vmem>>, vector<1x24x16xbf16>
    %3 = vector.shape_cast %2 : vector<1x24x16xbf16> to vector<24x16xbf16>
    %cst = arith.constant dense<0.000000e+00> : vector<256x16xf32>
    %4 = tpu.matmul %1, %3, %cst {dimension_numbers = #tpu.dot_dimension_numbers<[1], [0], [0], [1], [0, 0, 1, 1], [], []>} : vector<256x24xbf16>, vector<24x16xbf16>, vector<256x16xf32> -> vector<256x16xf32>
    %c0_5 = arith.constant 0 : index
    %c0_6 = arith.constant 0 : index
    %5 = vector.load %arg7[%c0_5, %c0_6] : memref<256x16xf32, #tpu.memory_space<vmem>>, vector<256x16xf32>
    tpu.vector_store %arg7[%c0_5, %c0_6], %4 {strides = array<i32>} : memref<256x16xf32, #tpu.memory_space<vmem>>, vector<256x16xf32>,
    %c0_7 = arith.constant 0 : index
    %c0_8 = arith.constant 0 : index
    %6 = vector.load %arg7[%c0_7, %c0_8] : memref<256x16xf32, #tpu.memory_space<vmem>>, vector<256x16xf32>
    %c0_9 = arith.constant 0 : index
    %c16 = arith.constant 16 : index
    %c0_10 = arith.constant 0 : index
    %7 = vector.load %arg2[%c0_9, %c16, %c0_10] : memref<1x288x24xbf16, #tpu.memory_space<vmem>>, vector<1x256x24xbf16>
    %8 = vector.shape_cast %7 : vector<1x256x24xbf16> to vector<256x24xbf16>
    %c1 = arith.constant 1 : index
    %c0_11 = arith.constant 0 : index
    %c0_12 = arith.constant 0 : index
    %9 = vector.load %arg3[%c1, %c0_11, %c0_12] : memref<3x24x16xbf16, #tpu.memory_space<vmem>>, vector<1x24x16xbf16>
    %10 = vector.shape_cast %9 : vector<1x24x16xbf16> to vector<24x16xbf16>
    %cst_13 = arith.constant dense<0.000000e+00> : vector<256x16xf32>
    %11 = tpu.matmul %8, %10, %cst_13 {dimension_numbers = #tpu.dot_dimension_numbers<[1], [0], [0], [1], [0, 0, 1, 1], [], []>} : vector<256x24xbf16>, vector<24x16xbf16>, vector<256x16xf32> -> vector<256x16xf32>
    %12 = arith.addf %6, %11 : vector<256x16xf32>
    %c0_14 = arith.constant 0 : index
    %c0_15 = arith.constant 0 : index
    %13 = vector.load %arg7[%c0_14, %c0_15] : memref<256x16xf32, #tpu.memory_space<vmem>>, vector<256x16xf32>
    tpu.vector_store %arg7[%c0_14, %c0_15], %12 {strides = array<i32>} : memref<256x16xf32, #tpu.memory_space<vmem>>, vector<256x16xf32>,
    %c0_16 = arith.constant 0 : index
    %c0_17 = arith.constant 0 : index
    %14 = vector.load %arg7[%c0_16, %c0_17] : memref<256x16xf32, #tpu.memory_space<vmem>>, vector<256x16xf32>
    %c0_18 = arith.constant 0 : index
    %c32 = arith.constant 32 : index
    %c0_19 = arith.constant 0 : index
    %15 = vector.load %arg2[%c0_18, %c32, %c0_19] : memref<1x288x24xbf16, #tpu.memory_space<vmem>>, vector<1x256x24xbf16>
    %16 = vector.shape_cast %15 : vector<1x256x24xbf16> to vector<256x24xbf16>
    %c2 = arith.constant 2 : index
    %c0_20 = arith.constant 0 : index
    %c0_21 = arith.constant 0 : index
    %17 = vector.load %arg3[%c2, %c0_20, %c0_21] : memref<3x24x16xbf16, #tpu.memory_space<vmem>>, vector<1x24x16xbf16>
    %18 = vector.shape_cast %17 : vector<1x24x16xbf16> to vector<24x16xbf16>
    %cst_22 = arith.constant dense<0.000000e+00> : vector<256x16xf32>
    %19 = tpu.matmul %16, %18, %cst_22 {dimension_numbers = #tpu.dot_dimension_numbers<[1], [0], [0], [1], [0, 0, 1, 1], [], []>} : vector<256x24xbf16>, vector<24x16xbf16>, vector<256x16xf32> -> vector<256x16xf32>
    %20 = arith.addf %14, %19 : vector<256x16xf32>
    %c0_23 = arith.constant 0 : index
    %c0_24 = arith.constant 0 : index
    %21 = vector.load %arg7[%c0_23, %c0_24] : memref<256x16xf32, #tpu.memory_space<vmem>>, vector<256x16xf32>
    tpu.vector_store %arg7[%c0_23, %c0_24], %20 {strides = array<i32>} : memref<256x16xf32, #tpu.memory_space<vmem>>, vector<256x16xf32>,
    %c0_25 = arith.constant 0 : index
    %c0_26 = arith.constant 0 : index
    %22 = vector.load %arg7[%c0_25, %c0_26] : memref<256x16xf32, #tpu.memory_space<vmem>>, vector<256x16xf32>
    %c0_27 = arith.constant 0 : index
    %c0_28 = arith.constant 0 : index
    %23 = vector.load %arg4[%c0_27, %c0_28] : memref<1x16xf32, #tpu.memory_space<vmem>>, vector<1x16xf32>
    %24 = vector.broadcast %23 : vector<1x16xf32> to vector<256x16xf32>
    %25 = arith.addf %22, %24 : vector<256x16xf32>
    %cst_29 = arith.constant 0.000000e+00 : f32
    %26 = vector.broadcast %cst_29 : f32 to vector<256x16xf32>
    %27 = arith.maximumf %25, %26 : vector<256x16xf32>
    %c0_30 = arith.constant 0 : index
    %c0_31 = arith.constant 0 : index
    %c0_32 = arith.constant 0 : index
    %28 = vector.load %arg5[%c0_30, %c0_31, %c0_32] : memref<1x256x16xf32, #tpu.memory_space<vmem>>, vector<1x256x16xf32>
    %29 = vector.shape_cast %28 : vector<1x256x16xf32> to vector<256x16xf32>
    %30 = vector.shape_cast %27 : vector<256x16xf32> to vector<1x256x16xf32>
    tpu.vector_store %arg5[%c0_30, %c0_31, %c0_32], %30 {strides = array<i32>} : memref<1x256x16xf32, #tpu.memory_space<vmem>>, vector<1x256x16xf32>,
    %31 = vector.shape_cast %27 : vector<256x16xf32> to vector<8x32x16xf32>
    %32 = vector.extract_strided_slice %31 {offsets = [0, 0, 0], sizes = [8, 16, 16], strides = [1, 1, 1]} : vector<8x32x16xf32> to vector<8x16x16xf32>
    %33 = vector.extract_strided_slice %31 {offsets = [0, 16, 0], sizes = [8, 16, 16], strides = [1, 1, 1]} : vector<8x32x16xf32> to vector<8x16x16xf32>
    %34 = arith.maximumf %32, %33 : vector<8x16x16xf32>
    %35 = vector.shape_cast %34 : vector<8x16x16xf32> to vector<64x2x16xf32>
    %36 = vector.extract_strided_slice %35 {offsets = [0, 0, 0], sizes = [64, 1, 16], strides = [1, 1, 1]} : vector<64x2x16xf32> to vector<64x1x16xf32>
    %37 = vector.shape_cast %36 : vector<64x1x16xf32> to vector<64x16xf32>
    %38 = vector.extract_strided_slice %35 {offsets = [0, 1, 0], sizes = [64, 1, 16], strides = [1, 1, 1]} : vector<64x2x16xf32> to vector<64x1x16xf32>
    %39 = vector.shape_cast %38 : vector<64x1x16xf32> to vector<64x16xf32>
    %40 = arith.maximumf %37, %39 : vector<64x16xf32>
    %41 = arith.truncf %40 : vector<64x16xf32> to vector<64x16xbf16>
    %c0_33 = arith.constant 0 : index
    %c0_34 = arith.constant 0 : index
    %c0_35 = arith.constant 0 : index
    %42 = vector.load %arg6[%c0_33, %c0_34, %c0_35] : memref<1x64x16xbf16, #tpu.memory_space<vmem>>, vector<1x64x16xbf16>
    %43 = vector.shape_cast %42 : vector<1x64x16xbf16> to vector<64x16xbf16>
    %44 = vector.shape_cast %41 : vector<64x16xbf16> to vector<1x64x16xbf16>
    tpu.vector_store %arg6[%c0_33, %c0_34, %c0_35], %44 {strides = array<i32>} : memref<1x64x16xbf16, #tpu.memory_space<vmem>>, vector<1x64x16xbf16>,
    return
  }
  func.func @transform_0(%arg0: i32, %arg1: i32) -> (i32, i32, i32) {
    %c0_i32 = arith.constant 0 : i32
    %c0_i32_0 = arith.constant 0 : i32
    %c0_i32_1 = arith.constant 0 : i32
    return %arg1, %c0_i32, %c0_i32_0 : i32, i32, i32
  }
  func.func @transform_1(%arg0: i32, %arg1: i32) -> (i32, i32, i32) {
    %c0_i32 = arith.constant 0 : i32
    %c0_i32_0 = arith.constant 0 : i32
    %c0_i32_1 = arith.constant 0 : i32
    return %c0_i32, %c0_i32_0, %arg0 : i32, i32, i32
  }
  func.func @transform_2(%arg0: i32, %arg1: i32) -> (i32, i32) {
    %c0_i32 = arith.constant 0 : i32
    %c0_i32_0 = arith.constant 0 : i32
    return %c0_i32, %arg0 : i32, i32
  }
  func.func @transform_3(%arg0: i32, %arg1: i32) -> (i32, i32, i32) {
    %c0_i32 = arith.constant 0 : i32
    %c0_i32_0 = arith.constant 0 : i32
    return %arg1, %c0_i32, %arg0 : i32, i32, i32
  }
  func.func @transform_4(%arg0: i32, %arg1: i32) -> (i32, i32, i32) {
    %c0_i32 = arith.constant 0 : i32
    %c0_i32_0 = arith.constant 0 : i32
    return %arg1, %c0_i32, %arg0 : i32, i32, i32
  }
}

</mosaic_0001>

<llo_original>
// kernel: tpu_custom_call.1
$region0: #{tpu_custom_call.1}
  #allocation0 [shape = 'u32[]', space=smem, size = 0x4, offset = 0x4, fixed_abs, tag = 'smem constant byte address 0x4 - core index']
  #allocation1 [shape = 'u32[144,128]{1,0:T(1,128)}', space=vmem, size = 0x12000, scoped, tag = 'internal scratch']
  #allocation2 [shape = 'f32[256,16]{1,0:T(8,128)}', space=vmem, size = 0x20000, scoped, tag = 'scratch operand']
  %s0 = inlined_call_operand.vmem [shape: bf16[2,288,24], index: 0, kind: input, shape index: {}]
  %s1 = inlined_call_operand.vmem [shape: bf16[3,24,16], index: 1, kind: input, shape index: {}]
  %s2 = inlined_call_operand.vmem [shape: f32[1,16], index: 2, kind: input, shape index: {}]
  %s3 = inlined_call_operand.vmem [shape: f32[2,256,16], index: 3, kind: output, shape index: {0}]
  %s4 = inlined_call_operand.vmem [shape: bf16[2,64,16], index: 4, kind: output, shape index: {1}]
  %5 = xla_tuple %s3, %s4
  %s6 = sld [smem:[#allocation0]]
  $region53: #{tpu_custom_call.1} parent=0
    _
  %s8 = ssub.s32 1, %s6
  %s9 = scalar_select 0, %s8, %s6
  loop: start=0, step=1, limit=4
  $region2: #{tpu_custom_call.1} parent=0 // loop_pre_header
    _
  $region3: #{tpu_custom_call.1} parent=0 // loop_header
    %s11 = sphi 0, %s15
    %p12 = scmp.ge.s32.totalorder %s11, 4
    %s18 = sphi 0, %s30
    %s19 = sphi 0, %s26
    %s20 = sphi 0, %s18
    %s21 = sphi 0, %s19
    %s22 = sphi 0, %s20
    %s23 = sphi 0, %s21
    %s33 = sphi 0, %s35
    %s36 = sphi 0, %s33
    %s37 = sphi 0, %s36
    %s53 = sphi 0, %s37
    %s59 = sphi 0, %s61
    %s62 = sphi 0, %s59
    %s63 = sphi 0, %s62
    %s79 = sphi 0, %s63
    %s85 = sphi 0, %s87
    %s88 = sphi 0, %s85
    %s89 = sphi 0, %s88
    %s105 = sphi 0, %s89
    %s113 = sphi 0, %s115
    %s116 = sphi 0, %s113
    %s117 = sphi 0, %s116
    %s133 = sphi 0, %s117
    %s141 = sphi 0, %s143
    %s144 = sphi 0, %s141
    %s145 = sphi 0, %s144
    %s161 = sphi 0, %s145
  $region4: #{tpu_custom_call.1} parent=0 // loop_header_branch
    %14 = sbr.rel (%p12) target = $region8
  $region5: #{tpu_custom_call.1} parent=0 // loop_body
    %s16 = ssub.s32 %s11, 1
    %s17 = ssub.s32 %s11, 2
    %s24 = sadd.s32 1, %s19
    %p25 = scmp.ge.s32.totalorder %s24, 2
    %s26 = scalar_select %p25, 0, %s24
    %s27 = sadd.s32 1, %s18
    %s28 = scalar_select %p25, %s27, %s18
    %p29 = scmp.ge.s32.totalorder %s28, 1
    %s30 = scalar_select %p29, 0, %s28
    %s31 = ssub.s32 %s19, %s26
    %p32 = scmp.eq.s32.totalorder %s31, 0
    %s34 = sadd.s32 %s33, 1
    %s35 = scalar_select %p32, %s33, %s34
    %p38 = pneg %p32
    %p39 = scmp.eq.s32.totalorder %s11, 1
    %p40 = por %p38, %p39
    %p41 = scmp.ne.s32.totalorder %s33, %s36
    %p42 = scmp.eq.s32.totalorder %s11, 0
    %p43 = por %p41, %p42
    %p44 = scmp.ne.s32.totalorder %s33, %s36
    %p45 = scmp.eq.s32.totalorder %s16, 1
    %p46 = por %p44, %p45
    %p47 = scmp.ne.s32.totalorder %s36, %s37
    %p48 = scmp.eq.s32.totalorder %s16, 0
    %p49 = por %p47, %p48
    %p50 = scmp.ne.s32.totalorder %s36, %s37
    %p51 = scmp.eq.s32.totalorder %s17, 1
    %p52 = por %p50, %p51
    %p54 = scmp.ne.s32.totalorder %s37, %s53
    %p55 = scmp.eq.s32.totalorder %s17, 0
    %p56 = por %p54, %p55
    %s57 = ssub.s32 %s18, %s30
    %p58 = scmp.eq.s32.totalorder %s57, 0
    %s60 = sadd.s32 %s59, 1
    %s61 = scalar_select %p58, %s59, %s60
    %p64 = pneg %p58
    %p65 = scmp.eq.s32.totalorder %s11, 1
    %p66 = por %p64, %p65
    %p67 = scmp.ne.s32.totalorder %s59, %s62
    %p68 = scmp.eq.s32.totalorder %s11, 0
    %p69 = por %p67, %p68
    %p70 = scmp.ne.s32.totalorder %s59, %s62
    %p71 = scmp.eq.s32.totalorder %s16, 1
    %p72 = por %p70, %p71
    %p73 = scmp.ne.s32.totalorder %s62, %s63
    %p74 = scmp.eq.s32.totalorder %s16, 0
    %p75 = por %p73, %p74
    %p76 = scmp.ne.s32.totalorder %s62, %s63
    %p77 = scmp.eq.s32.totalorder %s17, 1
    %p78 = por %p76, %p77
    %p80 = scmp.ne.s32.totalorder %s63, %s79
    %p81 = scmp.eq.s32.totalorder %s17, 0
    %p82 = por %p80, %p81
    %s83 = ssub.s32 %s18, %s30
    %p84 = scmp.eq.s32.totalorder %s83, 0
    %s86 = sadd.s32 %s85, 1
    %s87 = scalar_select %p84, %s85, %s86
    %p90 = pneg %p84
    %p91 = scmp.eq.s32.totalorder %s11, 1
    %p92 = por %p90, %p91
    %p93 = scmp.ne.s32.totalorder %s85, %s88
    %p94 = scmp.eq.s32.totalorder %s11, 0
    %p95 = por %p93, %p94
    %p96 = scmp.ne.s32.totalorder %s85, %s88
    %p97 = scmp.eq.s32.totalorder %s16, 1
    %p98 = por %p96, %p97
    %p99 = scmp.ne.s32.totalorder %s88, %s89
    %p100 = scmp.eq.s32.totalorder %s16, 0
    %p101 = por %p99, %p100
    %p102 = scmp.ne.s32.totalorder %s88, %s89
    %p103 = scmp.eq.s32.totalorder %s17, 1
    %p104 = por %p102, %p103
    %p106 = scmp.ne.s32.totalorder %s89, %s105
    %p107 = scmp.eq.s32.totalorder %s17, 0
    %p108 = por %p106, %p107
    %s109 = ssub.s32 %s19, %s26
    %s110 = ssub.s32 %s18, %s30
    %s111 = sor.u32 %s109, %s110
    %p112 = scmp.eq.s32.totalorder %s111, 0
    %s114 = sadd.s32 %s113, 1
    %s115 = scalar_select %p112, %s113, %s114
    %p118 = pneg %p112
    %p119 = scmp.eq.s32.totalorder %s11, 1
    %p120 = por %p118, %p119
    %p121 = scmp.ne.s32.totalorder %s113, %s116
    %p122 = scmp.eq.s32.totalorder %s11, 0
    %p123 = por %p121, %p122
    %p124 = scmp.ne.s32.totalorder %s113, %s116
    %p125 = scmp.eq.s32.totalorder %s16, 1
    %p126 = por %p124, %p125
    %p127 = scmp.ne.s32.totalorder %s116, %s117
    %p128 = scmp.eq.s32.totalorder %s16, 0
    %p129 = por %p127, %p128
    %p130 = scmp.ne.s32.totalorder %s116, %s117
    %p131 = scmp.eq.s32.totalorder %s17, 1
    %p132 = por %p130, %p131
    %p134 = scmp.ne.s32.totalorder %s117, %s133
    %p135 = scmp.eq.s32.totalorder %s17, 0
    %p136 = por %p134, %p135
    %s137 = ssub.s32 %s19, %s26
    %s138 = ssub.s32 %s18, %s30
    %s139 = sor.u32 %s137, %s138
    %p140 = scmp.eq.s32.totalorder %s139, 0
    %s142 = sadd.s32 %s141, 1
    %s143 = scalar_select %p140, %s141, %s142
    %p146 = pneg %p140
    %p147 = scmp.eq.s32.totalorder %s11, 1
    %p148 = por %p146, %p147
    %p149 = scmp.ne.s32.totalorder %s141, %s144
    %p150 = scmp.eq.s32.totalorder %s11, 0
    %p151 = por %p149, %p150
    %p152 = scmp.ne.s32.totalorder %s141, %s144
    %p153 = scmp.eq.s32.totalorder %s16, 1
    %p154 = por %p152, %p153
    %p155 = scmp.ne.s32.totalorder %s144, %s145
    %p156 = scmp.eq.s32.totalorder %s16, 0
    %p157 = por %p155, %p156
    %p158 = scmp.ne.s32.totalorder %s144, %s145
    %p159 = scmp.eq.s32.totalorder %s17, 1
    %p160 = por %p158, %p159
    %p162 = scmp.ne.s32.totalorder %s145, %s161
    %p163 = scmp.eq.s32.totalorder %s17, 0
    %p164 = por %p162, %p163
    %p165 = scmp.le.s32.totalorder 1, %s11
    %p166 = scmp.lt.s32.totalorder %s11, 3
    %p167 = pnand %p165, %p166
    %p168 = pneg %p167
    // Predicated region
    $region9: #{tpu_custom_call.1} parent=5 // pred_check
      _
    $region10: #{tpu_custom_call.1} parent=5 // pred_check_branch
      %170 = sbr.rel (%p167) target = $region12
    $region11: #{tpu_custom_call.1} parent=5 // pred_region
      %s171 = ssub.s32 %s11, 1
      // Predicated region
      $region13: #{tpu_custom_call.1} parent=11 // pred_check
        %p172 = pneg %p75
      $region14: #{tpu_custom_call.1} parent=11 // pred_check_branch
        %174 = sbr.rel (%p172) target = $region16
      $region15: #{tpu_custom_call.1} parent=11 // pred_region
        %p175 = scmp.lt.s32.totalorder %s20, 0
        %s176 = scalar_select %p175, %s20, 0
        %s177 = smul.addr %s176, 4
        %s178 = scalar_lea.vmem %s1, %s177
      $region16: #{tpu_custom_call.1} parent=11 // pred_fallthru
        _
      // Predicated region
      $region17: #{tpu_custom_call.1} parent=11 // pred_check
        %p179 = pneg %p101
      $region18: #{tpu_custom_call.1} parent=11 // pred_check_branch
        %181 = sbr.rel (%p179) target = $region20
      $region19: #{tpu_custom_call.1} parent=11 // pred_region
        %p182 = scmp.lt.s32.totalorder %s20, 0
        %s183 = scalar_select %p182, %s20, 0
        %s184 = scalar_lea.vmem %s2, %s183
      $region20: #{tpu_custom_call.1} parent=11 // pred_fallthru
        _
    $region12: #{tpu_custom_call.1} parent=5 // pred_fallthru
      _
    %p185 = scmp.lt.s32.totalorder %s11, 2
    // Predicated region
    $region21: #{tpu_custom_call.1} parent=5 // pred_check
      %p186 = pneg %p185
    $region22: #{tpu_custom_call.1} parent=5 // pred_check_branch
      %188 = sbr.rel (%p186) target = $region24
    $region23: #{tpu_custom_call.1} parent=5 // pred_region
      // Predicated region
      $region25: #{tpu_custom_call.1} parent=23 // pred_check
        %p189 = pneg %p43
      $region26: #{tpu_custom_call.1} parent=23 // pred_check_branch
        %191 = sbr.rel (%p189) target = $region28
      $region27: #{tpu_custom_call.1} parent=23 // pred_region
        %p192 = scmp.lt.s32.totalorder %s19, 1
        %s193 = scalar_select %p192, %s19, 1
        %s194 = smul.addr %s193, 36
        %s195 = smul.addr %s194, 4
        %s196 = scalar_lea.vmem %s0, %s195
      $region28: #{tpu_custom_call.1} parent=23 // pred_fallthru
        _
    $region24: #{tpu_custom_call.1} parent=5 // pred_fallthru
      _
    %p197 = scmp.le.s32.totalorder 1, %s11
    %p198 = scmp.lt.s32.totalorder %s11, 3
    %p199 = pnand %p197, %p198
    %p200 = pneg %p199
    // Predicated region
    $region29: #{tpu_custom_call.1} parent=5 // pred_check
      _
    $region30: #{tpu_custom_call.1} parent=5 // pred_check_branch
      %202 = sbr.rel (%p199) target = $region32
    $region31: #{tpu_custom_call.1} parent=5 // pred_region
      %s203 = ssub.s32 %s11, 1
      %p204 = scmp.lt.s32.totalorder %s21, 1
      %s205 = scalar_select %p204, %s21, 1
      %s206 = smul.addr %s205, 36
      %s207 = smul.addr %s206, 4
      %s208 = scalar_lea.vmem %s0, %s207
      %p209 = pneg %p49
      %p210 = pneg %p46
      %p211 = scmp.lt.s32.totalorder %s20, 0
      %s212 = scalar_select %p211, %s20, 0
      %s213 = smul.addr %s212, 4
      %s214 = scalar_lea.vmem %s1, %s213
      %p215 = pneg %p75
      %p216 = pneg %p72
      %p217 = scmp.lt.s32.totalorder %s20, 0
      %s218 = scalar_select %p217, %s20, 0
      %s219 = scalar_lea.vmem %s2, %s218
      %p220 = pneg %p101
      %p221 = pneg %p98
      %p222 = pneg %p129
      %p223 = pneg %p126
      %p224 = scmp.lt.s32.totalorder %s21, 1
      %s225 = scalar_select %p224, %s21, 1
      %p226 = scmp.lt.s32.totalorder %s20, 0
      %s227 = scalar_select %p226, %s20, 0
      %s228 = smul.addr %s225, 32
      %s229 = sadd.s32 %s227, %s228
      %s230 = smul.addr %s229, 8
      %s231 = scalar_lea.vmem %s3, %s230
      %p232 = pneg %p157
      %p233 = pneg %p154
      %p234 = scmp.lt.s32.totalorder %s21, 1
      %s235 = scalar_select %p234, %s21, 1
      %p236 = scmp.lt.s32.totalorder %s20, 0
      %s237 = scalar_select %p236, %s20, 0
      %s238 = smul.addr %s235, 8
      %s239 = sadd.s32 %s237, %s238
      %s240 = smul.addr %s239, 4
      %s241 = scalar_lea.vmem %s4, %s240
      %p242 = scmp.lt.s32.totalorder %s21, 1
      %s243 = scalar_select %p242, %s21, 1
      %s244 = smul.addr %s243, 36
      %s245 = smul.addr %s244, 4
      %s246 = scalar_lea.vmem %s0, %s245
      %p247 = scmp.lt.s32.totalorder %s20, 0
      %s248 = scalar_select %p247, %s20, 0
      %s249 = smul.addr %s248, 4
      %s250 = scalar_lea.vmem %s1, %s249
      %p251 = scmp.lt.s32.totalorder %s20, 0
      %s252 = scalar_select %p251, %s20, 0
      %s253 = scalar_lea.vmem %s2, %s252
      %p254 = scmp.lt.s32.totalorder %s21, 1
      %s255 = scalar_select %p254, %s21, 1
      %p256 = scmp.lt.s32.totalorder %s20, 0
      %s257 = scalar_select %p256, %s20, 0
      %s258 = smul.addr %s255, 32
      %s259 = sadd.s32 %s257, %s258
      %s260 = smul.addr %s259, 8
      %s261 = scalar_lea.vmem %s3, %s260
      %p262 = scmp.lt.s32.totalorder %s21, 1
      %s263 = scalar_select %p262, %s21, 1
      %p264 = scmp.lt.s32.totalorder %s20, 0
      %s265 = scalar_select %p264, %s20, 0
      %s266 = smul.addr %s263, 8
      %s267 = sadd.s32 %s265, %s266
      %s268 = smul.addr %s267, 4
      %s269 = scalar_lea.vmem %s4, %s268
      %v271 = vld [vmem:[%s246] sm:$0xf]
      %v272 = vld [vmem:[%s246 + $0x4] sm:$0xf]
      %v273 = vld [vmem:[%s246 + $0x8] sm:$0xf]
      %v274 = vld [vmem:[%s246 + $0xc] sm:$0xf]
      %v275 = vld [vmem:[%s246 + $0x10] sm:$0xf]
      %v276 = vld [vmem:[%s246 + $0x14] sm:$0xf]
      %v277 = vld [vmem:[%s246 + $0x18] sm:$0xf]
      %v278 = vld [vmem:[%s246 + $0x1c] sm:$0xf]
      %v279 = vld [vmem:[%s246 + $0x20] sm:$0xf]
      %v280 = vld [vmem:[%s246 + $0x24] sm:$0xf]
      %v281 = vld [vmem:[%s246 + $0x28] sm:$0xf]
      %v282 = vld [vmem:[%s246 + $0x2c] sm:$0xf]
      %v283 = vld [vmem:[%s246 + $0x30] sm:$0xf]
      %v284 = vld [vmem:[%s246 + $0x34] sm:$0xf]
      %v285 = vld [vmem:[%s246 + $0x38] sm:$0xf]
      %v286 = vld [vmem:[%s246 + $0x3c] sm:$0xf]
      %v287 = vld [vmem:[%s246 + $0x40] sm:$0xf]
      %v288 = vld [vmem:[%s246 + $0x44] sm:$0xf]
      %v289 = vld [vmem:[%s246 + $0x48] sm:$0xf]
      %v290 = vld [vmem:[%s246 + $0x4c] sm:$0xf]
      %v291 = vld [vmem:[%s246 + $0x50] sm:$0xf]
      %v292 = vld [vmem:[%s246 + $0x54] sm:$0xf]
      %v293 = vld [vmem:[%s246 + $0x58] sm:$0xf]
      %v294 = vld [vmem:[%s246 + $0x5c] sm:$0xf]
      %v295 = vld [vmem:[%s246 + $0x60] sm:$0xf]
      %v296 = vld [vmem:[%s246 + $0x64] sm:$0xf]
      %v297 = vld [vmem:[%s246 + $0x68] sm:$0xf]
      %v298 = vld [vmem:[%s246 + $0x6c] sm:$0xf]
      %v299 = vld [vmem:[%s246 + $0x70] sm:$0xf]
      %v300 = vld [vmem:[%s246 + $0x74] sm:$0xf]
      %v301 = vld [vmem:[%s246 + $0x78] sm:$0xf]
      %v302 = vld [vmem:[%s246 + $0x7c] sm:$0xf]
      %v303 = vld [vmem:[%s250] sm:$0xf]
      %v304 = vld [vmem:[%s250 + $0x4] sm:$0xf]
      %v305 = vld [vmem:[%s250 + $0x8] sm:$0xf]
      %v338 = vunpack.c.l.b16 %v271
      %v339 = vunpack.c.l.b16 %v272
      %v340 = vunpack.c.l.b16 %v273
      %v341 = vunpack.c.l.b16 %v274
      %v342 = vunpack.c.l.b16 %v275
      %v343 = vunpack.c.l.b16 %v276
      %v344 = vunpack.c.l.b16 %v277
      %v345 = vunpack.c.l.b16 %v278
      %v346 = vunpack.c.l.b16 %v279
      %v347 = vunpack.c.l.b16 %v280
      %v348 = vunpack.c.l.b16 %v281
      %v349 = vunpack.c.l.b16 %v282
      %v350 = vunpack.c.l.b16 %v283
      %v351 = vunpack.c.l.b16 %v284
      %v352 = vunpack.c.l.b16 %v285
      %v353 = vunpack.c.l.b16 %v286
      %v354 = vunpack.c.l.b16 %v287
      %v355 = vunpack.c.l.b16 %v288
      %v356 = vunpack.c.l.b16 %v289
      %v357 = vunpack.c.l.b16 %v290
      %v358 = vunpack.c.l.b16 %v291
      %v359 = vunpack.c.l.b16 %v292
      %v360 = vunpack.c.l.b16 %v293
      %v361 = vunpack.c.l.b16 %v294
      %v362 = vunpack.c.l.b16 %v295
      %v363 = vunpack.c.l.b16 %v296
      %v364 = vunpack.c.l.b16 %v297
      %v365 = vunpack.c.l.b16 %v298
      %v366 = vunpack.c.l.b16 %v299
      %v367 = vunpack.c.l.b16 %v300
      %v368 = vunpack.c.l.b16 %v301
      %v369 = vunpack.c.l.b16 %v302
      %v370 = vpack.c.b16 %v339, %v338
      %v371 = vpack.c.b16 %v341, %v340
      %v372 = vpack.c.b16 %v343, %v342
      %v373 = vpack.c.b16 %v345, %v344
      %v374 = vpack.c.b16 %v347, %v346
      %v375 = vpack.c.b16 %v349, %v348
      %v376 = vpack.c.b16 %v351, %v350
      %v377 = vpack.c.b16 %v353, %v352
      %v378 = vpack.c.b16 %v355, %v354
      %v379 = vpack.c.b16 %v357, %v356
      %v380 = vpack.c.b16 %v359, %v358
      %v381 = vpack.c.b16 %v361, %v360
      %v382 = vpack.c.b16 %v363, %v362
      %v383 = vpack.c.b16 %v365, %v364
      %v384 = vpack.c.b16 %v367, %v366
      %v385 = vpack.c.b16 %v369, %v368
      %v389 = vunpack.c.l.b16 %v303
      %v390 = vunpack.c.l.b16 %v304
      %v391 = vunpack.c.l.b16 %v305
      %v392 = vpack.c.b16 %v390, %v389
      %v393 = vpack.c.b16 %v391, %v391
      %vm395 = vcmask 195584
      %v397 = vsel %vm395, %v370, 0
      %v400 = vsel %vm395, %v371, 0
      %v403 = vsel %vm395, %v372, 0
      %v406 = vsel %vm395, %v373, 0
      %v409 = vsel %vm395, %v374, 0
      %v412 = vsel %vm395, %v375, 0
      %v415 = vsel %vm395, %v376, 0
      %v418 = vsel %vm395, %v377, 0
      %v421 = vsel %vm395, %v378, 0
      %v424 = vsel %vm395, %v379, 0
      %v427 = vsel %vm395, %v380, 0
      %v430 = vsel %vm395, %v381, 0
      %v433 = vsel %vm395, %v382, 0
      %v436 = vsel %vm395, %v383, 0
      %v439 = vsel %vm395, %v384, 0
      %v442 = vsel %vm395, %v385, 0
      %vm444 = vcmask 1043456
      %v446 = vsel %vm444, %v393, 0
      %448 = vmatprep.subr.bf16.mxu0 0
      %449 = vmatpush1.bf16.msra.mxu0 0
      %450 = vmatprep.subr.bf16.mxu0 0
      %451 = vmatpush1.bf16.msra.mxu0 0
      %452 = vmatprep.subr.bf16.mxu0 0
      %453 = vmatpush1.bf16.msra.mxu0 0
      %454 = vmatprep.subr.bf16.mxu0 0
      %455 = vmatpush1.bf16.msra.mxu0 0
      %456 = vmatprep.subr.bf16.mxu0 0
      %457 = vmatpush1.bf16.msra.mxu0 0
      %458 = vmatprep.subr.bf16.mxu0 0
      %459 = vmatpush1.bf16.msra.mxu0 0
      %460 = vmatprep.subr.bf16.mxu0 0
      %461 = vmatpush1.bf16.msra.mxu0 %v446
      %462 = vmatprep.subr.bf16.mxu0 0
      %463 = vmatpush1.bf16.msra.mxu0 %v392
      %464 = vmatprep.subr.bf16.mxu0 0
      %465 = vmatpush2.bf16.msra.mxu0 0
      %466 = vmatprep.subr.bf16.mxu0 0
      %467 = vmatpush2.bf16.msra.mxu0 0
      %468 = vmatprep.subr.bf16.mxu0 0
      %469 = vmatpush2.bf16.msra.mxu0 0
      %470 = vmatprep.subr.bf16.mxu0 0
      %471 = vmatpush2.bf16.msra.mxu0 0
      %472 = vmatprep.subr.bf16.mxu0 0
      %473 = vmatpush2.bf16.msra.mxu0 0
      %474 = vmatprep.subr.bf16.mxu0 0
      %475 = vmatpush2.bf16.msra.mxu0 0
      %476 = vmatprep.subr.bf16.mxu0 0
      %477 = vmatpush2.bf16.msra.mxu0 0
      %478 = vmatprep.subr.bf16.mxu0 0
      %479 = vmatpush2.bf16.msra.mxu0 0
      %480 = vmatprep.mubr.bf16.mxu0 0
      %481 = vmatmul.mubr.bf16.gmra.mxu0 %v397
      %v482 = vpop.f32.mrf.mxu0
      %v483 = vadd.f32 0.0, %v482
      %v484 = vpop.f32.mrf.mxu0
      %v485 = vpop.f32.mrf.mxu0
      %v486 = vadd.f32 0.0, %v485
      %v487 = vpop.f32.mrf.mxu0
      %488 = vmatprep.mubr.bf16.mxu0 0
      %489 = vmatmul.mubr.bf16.gmra.mxu0 %v400
      %v490 = vpop.f32.mrf.mxu0
      %v491 = vadd.f32 0.0, %v490
      %v492 = vpop.f32.mrf.mxu0
      %v493 = vpop.f32.mrf.mxu0
      %v494 = vadd.f32 0.0, %v493
      %v495 = vpop.f32.mrf.mxu0
      %496 = vmatprep.mubr.bf16.mxu0 0
      %497 = vmatmul.mubr.bf16.gmra.mxu0 %v403
      %v498 = vpop.f32.mrf.mxu0
      %v499 = vadd.f32 0.0, %v498
      %v500 = vpop.f32.mrf.mxu0
      %v501 = vpop.f32.mrf.mxu0
      %v502 = vadd.f32 0.0, %v501
      %v503 = vpop.f32.mrf.mxu0
      %504 = vmatprep.mubr.bf16.mxu0 0
      %505 = vmatmul.mubr.bf16.gmra.mxu0 %v406
      %v506 = vpop.f32.mrf.mxu0
      %v507 = vadd.f32 0.0, %v506
      %v508 = vpop.f32.mrf.mxu0
      %v509 = vpop.f32.mrf.mxu0
      %v510 = vadd.f32 0.0, %v509
      %v511 = vpop.f32.mrf.mxu0
      %512 = vmatprep.mubr.bf16.mxu0 0
      %513 = vmatmul.mubr.bf16.gmra.mxu0 %v409
      %v514 = vpop.f32.mrf.mxu0
      %v515 = vadd.f32 0.0, %v514
      %v516 = vpop.f32.mrf.mxu0
      %v517 = vpop.f32.mrf.mxu0
      %v518 = vadd.f32 0.0, %v517
      %v519 = vpop.f32.mrf.mxu0
      %520 = vmatprep.mubr.bf16.mxu0 0
      %521 = vmatmul.mubr.bf16.gmra.mxu0 %v412
      %v522 = vpop.f32.mrf.mxu0
      %v523 = vadd.f32 0.0, %v522
      %v524 = vpop.f32.mrf.mxu0
      %v525 = vpop.f32.mrf.mxu0
      %v526 = vadd.f32 0.0, %v525
      %v527 = vpop.f32.mrf.mxu0
      %528 = vmatprep.mubr.bf16.mxu0 0
      %529 = vmatmul.mubr.bf16.gmra.mxu0 %v415
      %v530 = vpop.f32.mrf.mxu0
      %v531 = vadd.f32 0.0, %v530
      %v532 = vpop.f32.mrf.mxu0
      %v533 = vpop.f32.mrf.mxu0
      %v534 = vadd.f32 0.0, %v533
      %v535 = vpop.f32.mrf.mxu0
      %536 = vmatprep.mubr.bf16.mxu0 0
      %537 = vmatmul.mubr.bf16.gmra.mxu0 %v418
      %v538 = vpop.f32.mrf.mxu0
      %v539 = vadd.f32 0.0, %v538
      %v540 = vpop.f32.mrf.mxu0
      %v541 = vpop.f32.mrf.mxu0
      %v542 = vadd.f32 0.0, %v541
      %v543 = vpop.f32.mrf.mxu0
      %544 = vmatprep.mubr.bf16.mxu0 0
      %545 = vmatmul.mubr.bf16.gmra.mxu0 %v421
      %v546 = vpop.f32.mrf.mxu0
      %v547 = vadd.f32 0.0, %v546
      %v548 = vpop.f32.mrf.mxu0
      %v549 = vpop.f32.mrf.mxu0
      %v550 = vadd.f32 0.0, %v549
      %v551 = vpop.f32.mrf.mxu0
      %552 = vmatprep.mubr.bf16.mxu0 0
      %553 = vmatmul.mubr.bf16.gmra.mxu0 %v424
      %v554 = vpop.f32.mrf.mxu0
      %v555 = vadd.f32 0.0, %v554
      %v556 = vpop.f32.mrf.mxu0
      %v557 = vpop.f32.mrf.mxu0
      %v558 = vadd.f32 0.0, %v557
      %v559 = vpop.f32.mrf.mxu0
      %560 = vmatprep.mubr.bf16.mxu0 0
      %561 = vmatmul.mubr.bf16.gmra.mxu0 %v427
      %v562 = vpop.f32.mrf.mxu0
      %v563 = vadd.f32 0.0, %v562
      %v564 = vpop.f32.mrf.mxu0
      %v565 = vpop.f32.mrf.mxu0
      %v566 = vadd.f32 0.0, %v565
      %v567 = vpop.f32.mrf.mxu0
      %568 = vmatprep.mubr.bf16.mxu0 0
      %569 = vmatmul.mubr.bf16.gmra.mxu0 %v430
      %v570 = vpop.f32.mrf.mxu0
      %v571 = vadd.f32 0.0, %v570
      %v572 = vpop.f32.mrf.mxu0
      %v573 = vpop.f32.mrf.mxu0
      %v574 = vadd.f32 0.0, %v573
      %v575 = vpop.f32.mrf.mxu0
      %576 = vmatprep.mubr.bf16.mxu0 0
      %577 = vmatmul.mubr.bf16.gmra.mxu0 %v433
      %v578 = vpop.f32.mrf.mxu0
      %v579 = vadd.f32 0.0, %v578
      %v580 = vpop.f32.mrf.mxu0
      %v581 = vpop.f32.mrf.mxu0
      %v582 = vadd.f32 0.0, %v581
      %v583 = vpop.f32.mrf.mxu0
      %584 = vmatprep.mubr.bf16.mxu0 0
      %585 = vmatmul.mubr.bf16.gmra.mxu0 %v436
      %v586 = vpop.f32.mrf.mxu0
      %v587 = vadd.f32 0.0, %v586
      %v588 = vpop.f32.mrf.mxu0
      %v589 = vpop.f32.mrf.mxu0
      %v590 = vadd.f32 0.0, %v589
      %v591 = vpop.f32.mrf.mxu0
      %592 = vmatprep.mubr.bf16.mxu0 0
      %593 = vmatmul.mubr.bf16.gmra.mxu0 %v439
      %v594 = vpop.f32.mrf.mxu0
      %v595 = vadd.f32 0.0, %v594
      %v596 = vpop.f32.mrf.mxu0
      %v597 = vpop.f32.mrf.mxu0
      %v598 = vadd.f32 0.0, %v597
      %v599 = vpop.f32.mrf.mxu0
      %600 = vmatprep.mubr.bf16.mxu0 0
      %601 = vmatmul.mubr.bf16.gmra.mxu0 %v442
      %v602 = vpop.f32.mrf.mxu0
      %v603 = vadd.f32 0.0, %v602
      %v604 = vpop.f32.mrf.mxu0
      %v605 = vpop.f32.mrf.mxu0
      %v606 = vadd.f32 0.0, %v605
      %v607 = vpop.f32.mrf.mxu0
      %608 = vdwg.mxu0
      %vm609 = vcmask 130048
      %610 = vst.msk [vmem:[#allocation2] sm:$0xff] %vm609, %v483
      %611 = vst.msk [vmem:[#allocation2 + $0x8] sm:$0xff] %vm609, %v486
      %612 = vst.msk [vmem:[#allocation2 + $0x10] sm:$0xff] %vm609, %v491
      %613 = vst.msk [vmem:[#allocation2 + $0x18] sm:$0xff] %vm609, %v494
      %614 = vst.msk [vmem:[#allocation2 + $0x20] sm:$0xff] %vm609, %v499
      %615 = vst.msk [vmem:[#allocation2 + $0x28] sm:$0xff] %vm609, %v502
      %616 = vst.msk [vmem:[#allocation2 + $0x30] sm:$0xff] %vm609, %v507
      %617 = vst.msk [vmem:[#allocation2 + $0x38] sm:$0xff] %vm609, %v510
      %618 = vst.msk [vmem:[#allocation2 + $0x40] sm:$0xff] %vm609, %v515
      %619 = vst.msk [vmem:[#allocation2 + $0x48] sm:$0xff] %vm609, %v518
      %620 = vst.msk [vmem:[#allocation2 + $0x50] sm:$0xff] %vm609, %v523
      %621 = vst.msk [vmem:[#allocation2 + $0x58] sm:$0xff] %vm609, %v526
      %622 = vst.msk [vmem:[#allocation2 + $0x60] sm:$0xff] %vm609, %v531
      %623 = vst.msk [vmem:[#allocation2 + $0x68] sm:$0xff] %vm609, %v534
      %624 = vst.msk [vmem:[#allocation2 + $0x70] sm:$0xff] %vm609, %v539
      %625 = vst.msk [vmem:[#allocation2 + $0x78] sm:$0xff] %vm609, %v542
      %626 = vst.msk [vmem:[#allocation2 + $0x80] sm:$0xff] %vm609, %v547
      %627 = vst.msk [vmem:[#allocation2 + $0x88] sm:$0xff] %vm609, %v550
      %628 = vst.msk [vmem:[#allocation2 + $0x90] sm:$0xff] %vm609, %v555
      %629 = vst.msk [vmem:[#allocation2 + $0x98] sm:$0xff] %vm609, %v558
      %630 = vst.msk [vmem:[#allocation2 + $0xa0] sm:$0xff] %vm609, %v563
      %631 = vst.msk [vmem:[#allocation2 + $0xa8] sm:$0xff] %vm609, %v566
      %632 = vst.msk [vmem:[#allocation2 + $0xb0] sm:$0xff] %vm609, %v571
      %633 = vst.msk [vmem:[#allocation2 + $0xb8] sm:$0xff] %vm609, %v574
      %634 = vst.msk [vmem:[#allocation2 + $0xc0] sm:$0xff] %vm609, %v579
      %635 = vst.msk [vmem:[#allocation2 + $0xc8] sm:$0xff] %vm609, %v582
      %636 = vst.msk [vmem:[#allocation2 + $0xd0] sm:$0xff] %vm609, %v587
      %637 = vst.msk [vmem:[#allocation2 + $0xd8] sm:$0xff] %vm609, %v590
      %638 = vst.msk [vmem:[#allocation2 + $0xe0] sm:$0xff] %vm609, %v595
      %639 = vst.msk [vmem:[#allocation2 + $0xe8] sm:$0xff] %vm609, %v598
      %640 = vst.msk [vmem:[#allocation2 + $0xf0] sm:$0xff] %vm609, %v603
      %641 = vst.msk [vmem:[#allocation2 + $0xf8] sm:$0xff] %vm609, %v606
      %v642 = vld [vmem:[#allocation2] sm:$0xff]
      %v643 = vld [vmem:[#allocation2 + $0x8] sm:$0xff]
      %v644 = vld [vmem:[#allocation2 + $0x10] sm:$0xff]
      %v645 = vld [vmem:[#allocation2 + $0x18] sm:$0xff]
      %v646 = vld [vmem:[#allocation2 + $0x20] sm:$0xff]
      %v647 = vld [vmem:[#allocation2 + $0x28] sm:$0xff]
      %v648 = vld [vmem:[#allocation2 + $0x30] sm:$0xff]
      %v649 = vld [vmem:[#allocation2 + $0x38] sm:$0xff]
      %v650 = vld [vmem:[#allocation2 + $0x40] sm:$0xff]
      %v651 = vld [vmem:[#allocation2 + $0x48] sm:$0xff]
      %v652 = vld [vmem:[#allocation2 + $0x50] sm:$0xff]
      %v653 = vld [vmem:[#allocation2 + $0x58] sm:$0xff]
      %v654 = vld [vmem:[#allocation2 + $0x60] sm:$0xff]
      %v655 = vld [vmem:[#allocation2 + $0x68] sm:$0xff]
      %v656 = vld [vmem:[#allocation2 + $0x70] sm:$0xff]
      %v657 = vld [vmem:[#allocation2 + $0x78] sm:$0xff]
      %v658 = vld [vmem:[#allocation2 + $0x80] sm:$0xff]
      %v659 = vld [vmem:[#allocation2 + $0x88] sm:$0xff]
      %v660 = vld [vmem:[#allocation2 + $0x90] sm:$0xff]
      %v661 = vld [vmem:[#allocation2 + $0x98] sm:$0xff]
      %v662 = vld [vmem:[#allocation2 + $0xa0] sm:$0xff]
      %v663 = vld [vmem:[#allocation2 + $0xa8] sm:$0xff]
      %v664 = vld [vmem:[#allocation2 + $0xb0] sm:$0xff]
      %v665 = vld [vmem:[#allocation2 + $0xb8] sm:$0xff]
      %v666 = vld [vmem:[#allocation2 + $0xc0] sm:$0xff]
      %v667 = vld [vmem:[#allocation2 + $0xc8] sm:$0xff]
      %v668 = vld [vmem:[#allocation2 + $0xd0] sm:$0xff]
      %v669 = vld [vmem:[#allocation2 + $0xd8] sm:$0xff]
      %v670 = vld [vmem:[#allocation2 + $0xe0] sm:$0xff]
      %v671 = vld [vmem:[#allocation2 + $0xe8] sm:$0xff]
      %v672 = vld [vmem:[#allocation2 + $0xf0] sm:$0xff]
      %v673 = vld [vmem:[#allocation2 + $0xf8] sm:$0xff]
      %v674 = vld [vmem:[%s246 + $0x8] sm:$0xf]
      %v675 = vld [vmem:[%s246 + $0xc] sm:$0xf]
      %v676 = vld [vmem:[%s246 + $0x10] sm:$0xf]
      %v677 = vld [vmem:[%s246 + $0x14] sm:$0xf]
      %v678 = vld [vmem:[%s246 + $0x18] sm:$0xf]
      %v679 = vld [vmem:[%s246 + $0x1c] sm:$0xf]
      %v680 = vld [vmem:[%s246 + $0x20] sm:$0xf]
      %v681 = vld [vmem:[%s246 + $0x24] sm:$0xf]
      %v682 = vld [vmem:[%s246 + $0x28] sm:$0xf]
      %v683 = vld [vmem:[%s246 + $0x2c] sm:$0xf]
      %v684 = vld [vmem:[%s246 + $0x30] sm:$0xf]
      %v685 = vld [vmem:[%s246 + $0x34] sm:$0xf]
      %v686 = vld [vmem:[%s246 + $0x38] sm:$0xf]
      %v687 = vld [vmem:[%s246 + $0x3c] sm:$0xf]
      %v688 = vld [vmem:[%s246 + $0x40] sm:$0xf]
      %v689 = vld [vmem:[%s246 + $0x44] sm:$0xf]
      %v690 = vld [vmem:[%s246 + $0x48] sm:$0xf]
      %v691 = vld [vmem:[%s246 + $0x4c] sm:$0xf]
      %v692 = vld [vmem:[%s246 + $0x50] sm:$0xf]
      %v693 = vld [vmem:[%s246 + $0x54] sm:$0xf]
      %v694 = vld [vmem:[%s246 + $0x58] sm:$0xf]
      %v695 = vld [vmem:[%s246 + $0x5c] sm:$0xf]
      %v696 = vld [vmem:[%s246 + $0x60] sm:$0xf]
      %v697 = vld [vmem:[%s246 + $0x64] sm:$0xf]
      %v698 = vld [vmem:[%s246 + $0x68] sm:$0xf]
      %v699 = vld [vmem:[%s246 + $0x6c] sm:$0xf]
      %v700 = vld [vmem:[%s246 + $0x70] sm:$0xf]
      %v701 = vld [vmem:[%s246 + $0x74] sm:$0xf]
      %v702 = vld [vmem:[%s246 + $0x78] sm:$0xf]
      %v703 = vld [vmem:[%s246 + $0x7c] sm:$0xf]
      %v704 = vld [vmem:[%s246 + $0x80] sm:$0xf]
      %v705 = vld [vmem:[%s246 + $0x84] sm:$0xf]
      %s706 = scalar_lea.vmem %s250, 12
      %v707 = vld [vmem:[%s706] sm:$0xf]
      %v708 = vld [vmem:[%s706 + $0x4] sm:$0xf]
      %v709 = vld [vmem:[%s706 + $0x8] sm:$0xf]
      %v742 = vunpack.c.l.b16 %v674
      %v743 = vunpack.c.l.b16 %v675
      %v744 = vunpack.c.l.b16 %v676
      %v745 = vunpack.c.l.b16 %v677
      %v746 = vunpack.c.l.b16 %v678
      %v747 = vunpack.c.l.b16 %v679
      %v748 = vunpack.c.l.b16 %v680
      %v749 = vunpack.c.l.b16 %v681
      %v750 = vunpack.c.l.b16 %v682
      %v751 = vunpack.c.l.b16 %v683
      %v752 = vunpack.c.l.b16 %v684
      %v753 = vunpack.c.l.b16 %v685
      %v754 = vunpack.c.l.b16 %v686
      %v755 = vunpack.c.l.b16 %v687
      %v756 = vunpack.c.l.b16 %v688
      %v757 = vunpack.c.l.b16 %v689
      %v758 = vunpack.c.l.b16 %v690
      %v759 = vunpack.c.l.b16 %v691
      %v760 = vunpack.c.l.b16 %v692
      %v761 = vunpack.c.l.b16 %v693
      %v762 = vunpack.c.l.b16 %v694
      %v763 = vunpack.c.l.b16 %v695
      %v764 = vunpack.c.l.b16 %v696
      %v765 = vunpack.c.l.b16 %v697
      %v766 = vunpack.c.l.b16 %v698
      %v767 = vunpack.c.l.b16 %v699
      %v768 = vunpack.c.l.b16 %v700
      %v769 = vunpack.c.l.b16 %v701
      %v770 = vunpack.c.l.b16 %v702
      %v771 = vunpack.c.l.b16 %v703
      %v772 = vunpack.c.l.b16 %v704
      %v773 = vunpack.c.l.b16 %v705
      %v774 = vpack.c.b16 %v743, %v742
      %v775 = vpack.c.b16 %v745, %v744
      %v776 = vpack.c.b16 %v747, %v746
      %v777 = vpack.c.b16 %v749, %v748
      %v778 = vpack.c.b16 %v751, %v750
      %v779 = vpack.c.b16 %v753, %v752
      %v780 = vpack.c.b16 %v755, %v754
      %v781 = vpack.c.b16 %v757, %v756
      %v782 = vpack.c.b16 %v759, %v758
      %v783 = vpack.c.b16 %v761, %v760
      %v784 = vpack.c.b16 %v763, %v762
      %v785 = vpack.c.b16 %v765, %v764
      %v786 = vpack.c.b16 %v767, %v766
      %v787 = vpack.c.b16 %v769, %v768
      %v788 = vpack.c.b16 %v771, %v770
      %v789 = vpack.c.b16 %v773, %v772
      %v793 = vunpack.c.l.b16 %v707
      %v794 = vunpack.c.l.b16 %v708
      %v795 = vunpack.c.l.b16 %v709
      %v796 = vpack.c.b16 %v794, %v793
      %v797 = vpack.c.b16 %v795, %v795
      %v800 = vsel %vm395, %v774, 0
      %v803 = vsel %vm395, %v775, 0
      %v806 = vsel %vm395, %v776, 0
      %v809 = vsel %vm395, %v777, 0
      %v812 = vsel %vm395, %v778, 0
      %v815 = vsel %vm395, %v779, 0
      %v818 = vsel %vm395, %v780, 0
      %v821 = vsel %vm395, %v781, 0
      %v824 = vsel %vm395, %v782, 0
      %v827 = vsel %vm395, %v783, 0
      %v830 = vsel %vm395, %v784, 0
      %v833 = vsel %vm395, %v785, 0
      %v836 = vsel %vm395, %v786, 0
      %v839 = vsel %vm395, %v787, 0
      %v842 = vsel %vm395, %v788, 0
      %v845 = vsel %vm395, %v789, 0
      %v848 = vsel %vm444, %v797, 0
      %850 = vmatprep.subr.bf16.mxu0 0
      %851 = vmatpush1.bf16.msra.mxu0 0
      %852 = vmatprep.subr.bf16.mxu0 0
      %853 = vmatpush1.bf16.msra.mxu0 0
      %854 = vmatprep.subr.bf16.mxu0 0
      %855 = vmatpush1.bf16.msra.mxu0 0
      %856 = vmatprep.subr.bf16.mxu0 0
      %857 = vmatpush1.bf16.msra.mxu0 0
      %858 = vmatprep.subr.bf16.mxu0 0
      %859 = vmatpush1.bf16.msra.mxu0 0
      %860 = vmatprep.subr.bf16.mxu0 0
      %861 = vmatpush1.bf16.msra.mxu0 0
      %862 = vmatprep.subr.bf16.mxu0 0
      %863 = vmatpush1.bf16.msra.mxu0 %v848
      %864 = vmatprep.subr.bf16.mxu0 0
      %865 = vmatpush1.bf16.msra.mxu0 %v796
      %866 = vmatprep.subr.bf16.mxu0 0
      %867 = vmatpush2.bf16.msra.mxu0 0
      %868 = vmatprep.subr.bf16.mxu0 0
      %869 = vmatpush2.bf16.msra.mxu0 0
      %870 = vmatprep.subr.bf16.mxu0 0
      %871 = vmatpush2.bf16.msra.mxu0 0
      %872 = vmatprep.subr.bf16.mxu0 0
      %873 = vmatpush2.bf16.msra.mxu0 0
      %874 = vmatprep.subr.bf16.mxu0 0
      %875 = vmatpush2.bf16.msra.mxu0 0
      %876 = vmatprep.subr.bf16.mxu0 0
      %877 = vmatpush2.bf16.msra.mxu0 0
      %878 = vmatprep.subr.bf16.mxu0 0
      %879 = vmatpush2.bf16.msra.mxu0 0
      %880 = vmatprep.subr.bf16.mxu0 0
      %881 = vmatpush2.bf16.msra.mxu0 0
      %882 = vmatprep.mubr.bf16.mxu0 0
      %883 = vmatmul.mubr.bf16.gmra.mxu0 %v800
      %v884 = vpop.f32.mrf.mxu0
      %v885 = vadd.f32 0.0, %v884
      %v886 = vpop.f32.mrf.mxu0
      %v887 = vpop.f32.mrf.mxu0
      %v888 = vadd.f32 0.0, %v887
      %v889 = vpop.f32.mrf.mxu0
      %890 = vmatprep.mubr.bf16.mxu0 0
      %891 = vmatmul.mubr.bf16.gmra.mxu0 %v803
      %v892 = vpop.f32.mrf.mxu0
      %v893 = vadd.f32 0.0, %v892
      %v894 = vpop.f32.mrf.mxu0
      %v895 = vpop.f32.mrf.mxu0
      %v896 = vadd.f32 0.0, %v895
      %v897 = vpop.f32.mrf.mxu0
      %898 = vmatprep.mubr.bf16.mxu0 0
      %899 = vmatmul.mubr.bf16.gmra.mxu0 %v806
      %v900 = vpop.f32.mrf.mxu0
      %v901 = vadd.f32 0.0, %v900
      %v902 = vpop.f32.mrf.mxu0
      %v903 = vpop.f32.mrf.mxu0
      %v904 = vadd.f32 0.0, %v903
      %v905 = vpop.f32.mrf.mxu0
      %906 = vmatprep.mubr.bf16.mxu0 0
      %907 = vmatmul.mubr.bf16.gmra.mxu0 %v809
      %v908 = vpop.f32.mrf.mxu0
      %v909 = vadd.f32 0.0, %v908
      %v910 = vpop.f32.mrf.mxu0
      %v911 = vpop.f32.mrf.mxu0
      %v912 = vadd.f32 0.0, %v911
      %v913 = vpop.f32.mrf.mxu0
      %914 = vmatprep.mubr.bf16.mxu0 0
      %915 = vmatmul.mubr.bf16.gmra.mxu0 %v812
      %v916 = vpop.f32.mrf.mxu0
      %v917 = vadd.f32 0.0, %v916
      %v918 = vpop.f32.mrf.mxu0
      %v919 = vpop.f32.mrf.mxu0
      %v920 = vadd.f32 0.0, %v919
      %v921 = vpop.f32.mrf.mxu0
      %922 = vmatprep.mubr.bf16.mxu0 0
      %923 = vmatmul.mubr.bf16.gmra.mxu0 %v815
      %v924 = vpop.f32.mrf.mxu0
      %v925 = vadd.f32 0.0, %v924
      %v926 = vpop.f32.mrf.mxu0
      %v927 = vpop.f32.mrf.mxu0
      %v928 = vadd.f32 0.0, %v927
      %v929 = vpop.f32.mrf.mxu0
      %930 = vmatprep.mubr.bf16.mxu0 0
      %931 = vmatmul.mubr.bf16.gmra.mxu0 %v818
      %v932 = vpop.f32.mrf.mxu0
      %v933 = vadd.f32 0.0, %v932
      %v934 = vpop.f32.mrf.mxu0
      %v935 = vpop.f32.mrf.mxu0
      %v936 = vadd.f32 0.0, %v935
      %v937 = vpop.f32.mrf.mxu0
      %938 = vmatprep.mubr.bf16.mxu0 0
      %939 = vmatmul.mubr.bf16.gmra.mxu0 %v821
      %v940 = vpop.f32.mrf.mxu0
      %v941 = vadd.f32 0.0, %v940
      %v942 = vpop.f32.mrf.mxu0
      %v943 = vpop.f32.mrf.mxu0
      %v944 = vadd.f32 0.0, %v943
      %v945 = vpop.f32.mrf.mxu0
      %946 = vmatprep.mubr.bf16.mxu0 0
      %947 = vmatmul.mubr.bf16.gmra.mxu0 %v824
      %v948 = vpop.f32.mrf.mxu0
      %v949 = vadd.f32 0.0, %v948
      %v950 = vpop.f32.mrf.mxu0
      %v951 = vpop.f32.mrf.mxu0
      %v952 = vadd.f32 0.0, %v951
      %v953 = vpop.f32.mrf.mxu0
      %954 = vmatprep.mubr.bf16.mxu0 0
      %955 = vmatmul.mubr.bf16.gmra.mxu0 %v827
      %v956 = vpop.f32.mrf.mxu0
      %v957 = vadd.f32 0.0, %v956
      %v958 = vpop.f32.mrf.mxu0
      %v959 = vpop.f32.mrf.mxu0
      %v960 = vadd.f32 0.0, %v959
      %v961 = vpop.f32.mrf.mxu0
      %962 = vmatprep.mubr.bf16.mxu0 0
      %963 = vmatmul.mubr.bf16.gmra.mxu0 %v830
      %v964 = vpop.f32.mrf.mxu0
      %v965 = vadd.f32 0.0, %v964
      %v966 = vpop.f32.mrf.mxu0
      %v967 = vpop.f32.mrf.mxu0
      %v968 = vadd.f32 0.0, %v967
      %v969 = vpop.f32.mrf.mxu0
      %970 = vmatprep.mubr.bf16.mxu0 0
      %971 = vmatmul.mubr.bf16.gmra.mxu0 %v833
      %v972 = vpop.f32.mrf.mxu0
      %v973 = vadd.f32 0.0, %v972
      %v974 = vpop.f32.mrf.mxu0
      %v975 = vpop.f32.mrf.mxu0
      %v976 = vadd.f32 0.0, %v975
      %v977 = vpop.f32.mrf.mxu0
      %978 = vmatprep.mubr.bf16.mxu0 0
      %979 = vmatmul.mubr.bf16.gmra.mxu0 %v836
      %v980 = vpop.f32.mrf.mxu0
      %v981 = vadd.f32 0.0, %v980
      %v982 = vpop.f32.mrf.mxu0
      %v983 = vpop.f32.mrf.mxu0
      %v984 = vadd.f32 0.0, %v983
      %v985 = vpop.f32.mrf.mxu0
      %986 = vmatprep.mubr.bf16.mxu0 0
      %987 = vmatmul.mubr.bf16.gmra.mxu0 %v839
      %v988 = vpop.f32.mrf.mxu0
      %v989 = vadd.f32 0.0, %v988
      %v990 = vpop.f32.mrf.mxu0
      %v991 = vpop.f32.mrf.mxu0
      %v992 = vadd.f32 0.0, %v991
      %v993 = vpop.f32.mrf.mxu0
      %994 = vmatprep.mubr.bf16.mxu0 0
      %995 = vmatmul.mubr.bf16.gmra.mxu0 %v842
      %v996 = vpop.f32.mrf.mxu0
      %v997 = vadd.f32 0.0, %v996
      %v998 = vpop.f32.mrf.mxu0
      %v999 = vpop.f32.mrf.mxu0
      %v1000 = vadd.f32 0.0, %v999
      %v1001 = vpop.f32.mrf.mxu0
      %1002 = vmatprep.mubr.bf16.mxu0 0
      %1003 = vmatmul.mubr.bf16.gmra.mxu0 %v845
      %v1004 = vpop.f32.mrf.mxu0
      %v1005 = vadd.f32 0.0, %v1004
      %v1006 = vpop.f32.mrf.mxu0
      %v1007 = vpop.f32.mrf.mxu0
      %v1008 = vadd.f32 0.0, %v1007
      %v1009 = vpop.f32.mrf.mxu0
      %1010 = vdwg.mxu0
      %v1011 = vadd.f32 %v642, %v885
      %v1012 = vadd.f32 %v643, %v888
      %v1013 = vadd.f32 %v644, %v893
      %v1014 = vadd.f32 %v645, %v896
      %v1015 = vadd.f32 %v646, %v901
      %v1016 = vadd.f32 %v647, %v904
      %v1017 = vadd.f32 %v648, %v909
      %v1018 = vadd.f32 %v649, %v912
      %v1019 = vadd.f32 %v650, %v917
      %v1020 = vadd.f32 %v651, %v920
      %v1021 = vadd.f32 %v652, %v925
      %v1022 = vadd.f32 %v653, %v928
      %v1023 = vadd.f32 %v654, %v933
      %v1024 = vadd.f32 %v655, %v936
      %v1025 = vadd.f32 %v656, %v941
      %v1026 = vadd.f32 %v657, %v944
      %v1027 = vadd.f32 %v658, %v949
      %v1028 = vadd.f32 %v659, %v952
      %v1029 = vadd.f32 %v660, %v957
      %v1030 = vadd.f32 %v661, %v960
      %v1031 = vadd.f32 %v662, %v965
      %v1032 = vadd.f32 %v663, %v968
      %v1033 = vadd.f32 %v664, %v973
      %v1034 = vadd.f32 %v665, %v976
      %v1035 = vadd.f32 %v666, %v981
      %v1036 = vadd.f32 %v667, %v984
      %v1037 = vadd.f32 %v668, %v989
      %v1038 = vadd.f32 %v669, %v992
      %v1039 = vadd.f32 %v670, %v997
      %v1040 = vadd.f32 %v671, %v1000
      %v1041 = vadd.f32 %v672, %v1005
      %v1042 = vadd.f32 %v673, %v1008
      %1043 = vst.msk [vmem:[#allocation2] sm:$0xff] %vm609, %v1011
      %1044 = vst.msk [vmem:[#allocation2 + $0x8] sm:$0xff] %vm609, %v1012
      %1045 = vst.msk [vmem:[#allocation2 + $0x10] sm:$0xff] %vm609, %v1013
      %1046 = vst.msk [vmem:[#allocation2 + $0x18] sm:$0xff] %vm609, %v1014
      %1047 = vst.msk [vmem:[#allocation2 + $0x20] sm:$0xff] %vm609, %v1015
      %1048 = vst.msk [vmem:[#allocation2 + $0x28] sm:$0xff] %vm609, %v1016
      %1049 = vst.msk [vmem:[#allocation2 + $0x30] sm:$0xff] %vm609, %v1017
      %1050 = vst.msk [vmem:[#allocation2 + $0x38] sm:$0xff] %vm609, %v1018
      %1051 = vst.msk [vmem:[#allocation2 + $0x40] sm:$0xff] %vm609, %v1019
      %1052 = vst.msk [vmem:[#allocation2 + $0x48] sm:$0xff] %vm609, %v1020
      %1053 = vst.msk [vmem:[#allocation2 + $0x50] sm:$0xff] %vm609, %v1021
      %1054 = vst.msk [vmem:[#allocation2 + $0x58] sm:$0xff] %vm609, %v1022
      %1055 = vst.msk [vmem:[#allocation2 + $0x60] sm:$0xff] %vm609, %v1023
      %1056 = vst.msk [vmem:[#allocation2 + $0x68] sm:$0xff] %vm609, %v1024
      %1057 = vst.msk [vmem:[#allocation2 + $0x70] sm:$0xff] %vm609, %v1025
      %1058 = vst.msk [vmem:[#allocation2 + $0x78] sm:$0xff] %vm609, %v1026
      %1059 = vst.msk [vmem:[#allocation2 + $0x80] sm:$0xff] %vm609, %v1027
      %1060 = vst.msk [vmem:[#allocation2 + $0x88] sm:$0xff] %vm609, %v1028
      %1061 = vst.msk [vmem:[#allocation2 + $0x90] sm:$0xff] %vm609, %v1029
      %1062 = vst.msk [vmem:[#allocation2 + $0x98] sm:$0xff] %vm609, %v1030
      %1063 = vst.msk [vmem:[#allocation2 + $0xa0] sm:$0xff] %vm609, %v1031
      %1064 = vst.msk [vmem:[#allocation2 + $0xa8] sm:$0xff] %vm609, %v1032
      %1065 = vst.msk [vmem:[#allocation2 + $0xb0] sm:$0xff] %vm609, %v1033
      %1066 = vst.msk [vmem:[#allocation2 + $0xb8] sm:$0xff] %vm609, %v1034
      %1067 = vst.msk [vmem:[#allocation2 + $0xc0] sm:$0xff] %vm609, %v1035
      %1068 = vst.msk [vmem:[#allocation2 + $0xc8] sm:$0xff] %vm609, %v1036
      %1069 = vst.msk [vmem:[#allocation2 + $0xd0] sm:$0xff] %vm609, %v1037
      %1070 = vst.msk [vmem:[#allocation2 + $0xd8] sm:$0xff] %vm609, %v1038
      %1071 = vst.msk [vmem:[#allocation2 + $0xe0] sm:$0xff] %vm609, %v1039
      %1072 = vst.msk [vmem:[#allocation2 + $0xe8] sm:$0xff] %vm609, %v1040
      %1073 = vst.msk [vmem:[#allocation2 + $0xf0] sm:$0xff] %vm609, %v1041
      %1074 = vst.msk [vmem:[#allocation2 + $0xf8] sm:$0xff] %vm609, %v1042
      %v1075 = vld [vmem:[#allocation2] sm:$0xff]
      %v1076 = vld [vmem:[#allocation2 + $0x8] sm:$0xff]
      %v1077 = vld [vmem:[#allocation2 + $0x10] sm:$0xff]
      %v1078 = vld [vmem:[#allocation2 + $0x18] sm:$0xff]
      %v1079 = vld [vmem:[#allocation2 + $0x20] sm:$0xff]
      %v1080 = vld [vmem:[#allocation2 + $0x28] sm:$0xff]
      %v1081 = vld [vmem:[#allocation2 + $0x30] sm:$0xff]
      %v1082 = vld [vmem:[#allocation2 + $0x38] sm:$0xff]
      %v1083 = vld [vmem:[#allocation2 + $0x40] sm:$0xff]
      %v1084 = vld [vmem:[#allocation2 + $0x48] sm:$0xff]
      %v1085 = vld [vmem:[#allocation2 + $0x50] sm:$0xff]
      %v1086 = vld [vmem:[#allocation2 + $0x58] sm:$0xff]
      %v1087 = vld [vmem:[#allocation2 + $0x60] sm:$0xff]
      %v1088 = vld [vmem:[#allocation2 + $0x68] sm:$0xff]
      %v1089 = vld [vmem:[#allocation2 + $0x70] sm:$0xff]
      %v1090 = vld [vmem:[#allocation2 + $0x78] sm:$0xff]
      %v1091 = vld [vmem:[#allocation2 + $0x80] sm:$0xff]
      %v1092 = vld [vmem:[#allocation2 + $0x88] sm:$0xff]
      %v1093 = vld [vmem:[#allocation2 + $0x90] sm:$0xff]
      %v1094 = vld [vmem:[#allocation2 + $0x98] sm:$0xff]
      %v1095 = vld [vmem:[#allocation2 + $0xa0] sm:$0xff]
      %v1096 = vld [vmem:[#allocation2 + $0xa8] sm:$0xff]
      %v1097 = vld [vmem:[#allocation2 + $0xb0] sm:$0xff]
      %v1098 = vld [vmem:[#allocation2 + $0xb8] sm:$0xff]
      %v1099 = vld [vmem:[#allocation2 + $0xc0] sm:$0xff]
      %v1100 = vld [vmem:[#allocation2 + $0xc8] sm:$0xff]
      %v1101 = vld [vmem:[#allocation2 + $0xd0] sm:$0xff]
      %v1102 = vld [vmem:[#allocation2 + $0xd8] sm:$0xff]
      %v1103 = vld [vmem:[#allocation2 + $0xe0] sm:$0xff]
      %v1104 = vld [vmem:[#allocation2 + $0xe8] sm:$0xff]
      %v1105 = vld [vmem:[#allocation2 + $0xf0] sm:$0xff]
      %v1106 = vld [vmem:[#allocation2 + $0xf8] sm:$0xff]
      %v1107 = vld [vmem:[%s246 + $0x10] sm:$0xf]
      %v1108 = vld [vmem:[%s246 + $0x14] sm:$0xf]
      %v1109 = vld [vmem:[%s246 + $0x18] sm:$0xf]
      %v1110 = vld [vmem:[%s246 + $0x1c] sm:$0xf]
      %v1111 = vld [vmem:[%s246 + $0x20] sm:$0xf]
      %v1112 = vld [vmem:[%s246 + $0x24] sm:$0xf]
      %v1113 = vld [vmem:[%s246 + $0x28] sm:$0xf]
      %v1114 = vld [vmem:[%s246 + $0x2c] sm:$0xf]
      %v1115 = vld [vmem:[%s246 + $0x30] sm:$0xf]
      %v1116 = vld [vmem:[%s246 + $0x34] sm:$0xf]
      %v1117 = vld [vmem:[%s246 + $0x38] sm:$0xf]
      %v1118 = vld [vmem:[%s246 + $0x3c] sm:$0xf]
      %v1119 = vld [vmem:[%s246 + $0x40] sm:$0xf]
      %v1120 = vld [vmem:[%s246 + $0x44] sm:$0xf]
      %v1121 = vld [vmem:[%s246 + $0x48] sm:$0xf]
      %v1122 = vld [vmem:[%s246 + $0x4c] sm:$0xf]
      %v1123 = vld [vmem:[%s246 + $0x50] sm:$0xf]
      %v1124 = vld [vmem:[%s246 + $0x54] sm:$0xf]
      %v1125 = vld [vmem:[%s246 + $0x58] sm:$0xf]
      %v1126 = vld [vmem:[%s246 + $0x5c] sm:$0xf]
      %v1127 = vld [vmem:[%s246 + $0x60] sm:$0xf]
      %v1128 = vld [vmem:[%s246 + $0x64] sm:$0xf]
      %v1129 = vld [vmem:[%s246 + $0x68] sm:$0xf]
      %v1130 = vld [vmem:[%s246 + $0x6c] sm:$0xf]
      %v1131 = vld [vmem:[%s246 + $0x70] sm:$0xf]
      %v1132 = vld [vmem:[%s246 + $0x74] sm:$0xf]
      %v1133 = vld [vmem:[%s246 + $0x78] sm:$0xf]
      %v1134 = vld [vmem:[%s246 + $0x7c] sm:$0xf]
      %v1135 = vld [vmem:[%s246 + $0x80] sm:$0xf]
      %v1136 = vld [vmem:[%s246 + $0x84] sm:$0xf]
      %v1137 = vld [vmem:[%s246 + $0x88] sm:$0xf]
      %v1138 = vld [vmem:[%s246 + $0x8c] sm:$0xf]
      %s1139 = scalar_lea.vmem %s250, 24
      %v1140 = vld [vmem:[%s1139] sm:$0xf]
      %v1141 = vld [vmem:[%s1139 + $0x4] sm:$0xf]
      %v1142 = vld [vmem:[%s1139 + $0x8] sm:$0xf]
      %v1175 = vunpack.c.l.b16 %v1107
      %v1176 = vunpack.c.l.b16 %v1108
      %v1177 = vunpack.c.l.b16 %v1109
      %v1178 = vunpack.c.l.b16 %v1110
      %v1179 = vunpack.c.l.b16 %v1111
      %v1180 = vunpack.c.l.b16 %v1112
      %v1181 = vunpack.c.l.b16 %v1113
      %v1182 = vunpack.c.l.b16 %v1114
      %v1183 = vunpack.c.l.b16 %v1115
      %v1184 = vunpack.c.l.b16 %v1116
      %v1185 = vunpack.c.l.b16 %v1117
      %v1186 = vunpack.c.l.b16 %v1118
      %v1187 = vunpack.c.l.b16 %v1119
      %v1188 = vunpack.c.l.b16 %v1120
      %v1189 = vunpack.c.l.b16 %v1121
      %v1190 = vunpack.c.l.b16 %v1122
      %v1191 = vunpack.c.l.b16 %v1123
      %v1192 = vunpack.c.l.b16 %v1124
      %v1193 = vunpack.c.l.b16 %v1125
      %v1194 = vunpack.c.l.b16 %v1126
      %v1195 = vunpack.c.l.b16 %v1127
      %v1196 = vunpack.c.l.b16 %v1128
      %v1197 = vunpack.c.l.b16 %v1129
      %v1198 = vunpack.c.l.b16 %v1130
      %v1199 = vunpack.c.l.b16 %v1131
      %v1200 = vunpack.c.l.b16 %v1132
      %v1201 = vunpack.c.l.b16 %v1133
      %v1202 = vunpack.c.l.b16 %v1134
      %v1203 = vunpack.c.l.b16 %v1135
      %v1204 = vunpack.c.l.b16 %v1136
      %v1205 = vunpack.c.l.b16 %v1137
      %v1206 = vunpack.c.l.b16 %v1138
      %v1207 = vpack.c.b16 %v1176, %v1175
      %v1208 = vpack.c.b16 %v1178, %v1177
      %v1209 = vpack.c.b16 %v1180, %v1179
      %v1210 = vpack.c.b16 %v1182, %v1181
      %v1211 = vpack.c.b16 %v1184, %v1183
      %v1212 = vpack.c.b16 %v1186, %v1185
      %v1213 = vpack.c.b16 %v1188, %v1187
      %v1214 = vpack.c.b16 %v1190, %v1189
      %v1215 = vpack.c.b16 %v1192, %v1191
      %v1216 = vpack.c.b16 %v1194, %v1193
      %v1217 = vpack.c.b16 %v1196, %v1195
      %v1218 = vpack.c.b16 %v1198, %v1197
      %v1219 = vpack.c.b16 %v1200, %v1199
      %v1220 = vpack.c.b16 %v1202, %v1201
      %v1221 = vpack.c.b16 %v1204, %v1203
      %v1222 = vpack.c.b16 %v1206, %v1205
      %v1226 = vunpack.c.l.b16 %v1140
      %v1227 = vunpack.c.l.b16 %v1141
      %v1228 = vunpack.c.l.b16 %v1142
      %v1229 = vpack.c.b16 %v1227, %v1226
      %v1230 = vpack.c.b16 %v1228, %v1228
      %v1233 = vsel %vm395, %v1207, 0
      %v1236 = vsel %vm395, %v1208, 0
      %v1239 = vsel %vm395, %v1209, 0
      %v1242 = vsel %vm395, %v1210, 0
      %v1245 = vsel %vm395, %v1211, 0
      %v1248 = vsel %vm395, %v1212, 0
      %v1251 = vsel %vm395, %v1213, 0
      %v1254 = vsel %vm395, %v1214, 0
      %v1257 = vsel %vm395, %v1215, 0
      %v1260 = vsel %vm395, %v1216, 0
      %v1263 = vsel %vm395, %v1217, 0
      %v1266 = vsel %vm395, %v1218, 0
      %v1269 = vsel %vm395, %v1219, 0
      %v1272 = vsel %vm395, %v1220, 0
      %v1275 = vsel %vm395, %v1221, 0
      %v1278 = vsel %vm395, %v1222, 0
      %v1281 = vsel %vm444, %v1230, 0
      %1283 = vmatprep.subr.bf16.mxu0 0
      %1284 = vmatpush1.bf16.msra.mxu0 0
      %1285 = vmatprep.subr.bf16.mxu0 0
      %1286 = vmatpush1.bf16.msra.mxu0 0
      %1287 = vmatprep.subr.bf16.mxu0 0
      %1288 = vmatpush1.bf16.msra.mxu0 0
      %1289 = vmatprep.subr.bf16.mxu0 0
      %1290 = vmatpush1.bf16.msra.mxu0 0
      %1291 = vmatprep.subr.bf16.mxu0 0
      %1292 = vmatpush1.bf16.msra.mxu0 0
      %1293 = vmatprep.subr.bf16.mxu0 0
      %1294 = vmatpush1.bf16.msra.mxu0 0
      %1295 = vmatprep.subr.bf16.mxu0 0
      %1296 = vmatpush1.bf16.msra.mxu0 %v1281
      %1297 = vmatprep.subr.bf16.mxu0 0
      %1298 = vmatpush1.bf16.msra.mxu0 %v1229
      %1299 = vmatprep.subr.bf16.mxu0 0
      %1300 = vmatpush2.bf16.msra.mxu0 0
      %1301 = vmatprep.subr.bf16.mxu0 0
      %1302 = vmatpush2.bf16.msra.mxu0 0
      %1303 = vmatprep.subr.bf16.mxu0 0
      %1304 = vmatpush2.bf16.msra.mxu0 0
      %1305 = vmatprep.subr.bf16.mxu0 0
      %1306 = vmatpush2.bf16.msra.mxu0 0
      %1307 = vmatprep.subr.bf16.mxu0 0
      %1308 = vmatpush2.bf16.msra.mxu0 0
      %1309 = vmatprep.subr.bf16.mxu0 0
      %1310 = vmatpush2.bf16.msra.mxu0 0
      %1311 = vmatprep.subr.bf16.mxu0 0
      %1312 = vmatpush2.bf16.msra.mxu0 0
      %1313 = vmatprep.subr.bf16.mxu0 0
      %1314 = vmatpush2.bf16.msra.mxu0 0
      %1315 = vmatprep.mubr.bf16.mxu0 0
      %1316 = vmatmul.mubr.bf16.gmra.mxu0 %v1233
      %v1317 = vpop.f32.mrf.mxu0
      %v1318 = vadd.f32 0.0, %v1317
      %v1319 = vpop.f32.mrf.mxu0
      %v1320 = vpop.f32.mrf.mxu0
      %v1321 = vadd.f32 0.0, %v1320
      %v1322 = vpop.f32.mrf.mxu0
      %1323 = vmatprep.mubr.bf16.mxu0 0
      %1324 = vmatmul.mubr.bf16.gmra.mxu0 %v1236
      %v1325 = vpop.f32.mrf.mxu0
      %v1326 = vadd.f32 0.0, %v1325
      %v1327 = vpop.f32.mrf.mxu0
      %v1328 = vpop.f32.mrf.mxu0
      %v1329 = vadd.f32 0.0, %v1328
      %v1330 = vpop.f32.mrf.mxu0
      %1331 = vmatprep.mubr.bf16.mxu0 0
      %1332 = vmatmul.mubr.bf16.gmra.mxu0 %v1239
      %v1333 = vpop.f32.mrf.mxu0
      %v1334 = vadd.f32 0.0, %v1333
      %v1335 = vpop.f32.mrf.mxu0
      %v1336 = vpop.f32.mrf.mxu0
      %v1337 = vadd.f32 0.0, %v1336
      %v1338 = vpop.f32.mrf.mxu0
      %1339 = vmatprep.mubr.bf16.mxu0 0
      %1340 = vmatmul.mubr.bf16.gmra.mxu0 %v1242
      %v1341 = vpop.f32.mrf.mxu0
      %v1342 = vadd.f32 0.0, %v1341
      %v1343 = vpop.f32.mrf.mxu0
      %v1344 = vpop.f32.mrf.mxu0
      %v1345 = vadd.f32 0.0, %v1344
      %v1346 = vpop.f32.mrf.mxu0
      %1347 = vmatprep.mubr.bf16.mxu0 0
      %1348 = vmatmul.mubr.bf16.gmra.mxu0 %v1245
      %v1349 = vpop.f32.mrf.mxu0
      %v1350 = vadd.f32 0.0, %v1349
      %v1351 = vpop.f32.mrf.mxu0
      %v1352 = vpop.f32.mrf.mxu0
      %v1353 = vadd.f32 0.0, %v1352
      %v1354 = vpop.f32.mrf.mxu0
      %1355 = vmatprep.mubr.bf16.mxu0 0
      %1356 = vmatmul.mubr.bf16.gmra.mxu0 %v1248
      %v1357 = vpop.f32.mrf.mxu0
      %v1358 = vadd.f32 0.0, %v1357
      %v1359 = vpop.f32.mrf.mxu0
      %v1360 = vpop.f32.mrf.mxu0
      %v1361 = vadd.f32 0.0, %v1360
      %v1362 = vpop.f32.mrf.mxu0
      %1363 = vmatprep.mubr.bf16.mxu0 0
      %1364 = vmatmul.mubr.bf16.gmra.mxu0 %v1251
      %v1365 = vpop.f32.mrf.mxu0
      %v1366 = vadd.f32 0.0, %v1365
      %v1367 = vpop.f32.mrf.mxu0
      %v1368 = vpop.f32.mrf.mxu0
      %v1369 = vadd.f32 0.0, %v1368
      %v1370 = vpop.f32.mrf.mxu0
      %1371 = vmatprep.mubr.bf16.mxu0 0
      %1372 = vmatmul.mubr.bf16.gmra.mxu0 %v1254
      %v1373 = vpop.f32.mrf.mxu0
      %v1374 = vadd.f32 0.0, %v1373
      %v1375 = vpop.f32.mrf.mxu0
      %v1376 = vpop.f32.mrf.mxu0
      %v1377 = vadd.f32 0.0, %v1376
      %v1378 = vpop.f32.mrf.mxu0
      %1379 = vmatprep.mubr.bf16.mxu0 0
      %1380 = vmatmul.mubr.bf16.gmra.mxu0 %v1257
      %v1381 = vpop.f32.mrf.mxu0
      %v1382 = vadd.f32 0.0, %v1381
      %v1383 = vpop.f32.mrf.mxu0
      %v1384 = vpop.f32.mrf.mxu0
      %v1385 = vadd.f32 0.0, %v1384
      %v1386 = vpop.f32.mrf.mxu0
      %1387 = vmatprep.mubr.bf16.mxu0 0
      %1388 = vmatmul.mubr.bf16.gmra.mxu0 %v1260
      %v1389 = vpop.f32.mrf.mxu0
      %v1390 = vadd.f32 0.0, %v1389
      %v1391 = vpop.f32.mrf.mxu0
      %v1392 = vpop.f32.mrf.mxu0
      %v1393 = vadd.f32 0.0, %v1392
      %v1394 = vpop.f32.mrf.mxu0
      %1395 = vmatprep.mubr.bf16.mxu0 0
      %1396 = vmatmul.mubr.bf16.gmra.mxu0 %v1263
      %v1397 = vpop.f32.mrf.mxu0
      %v1398 = vadd.f32 0.0, %v1397
      %v1399 = vpop.f32.mrf.mxu0
      %v1400 = vpop.f32.mrf.mxu0
      %v1401 = vadd.f32 0.0, %v1400
      %v1402 = vpop.f32.mrf.mxu0
      %1403 = vmatprep.mubr.bf16.mxu0 0
      %1404 = vmatmul.mubr.bf16.gmra.mxu0 %v1266
      %v1405 = vpop.f32.mrf.mxu0
      %v1406 = vadd.f32 0.0, %v1405
      %v1407 = vpop.f32.mrf.mxu0
      %v1408 = vpop.f32.mrf.mxu0
      %v1409 = vadd.f32 0.0, %v1408
      %v1410 = vpop.f32.mrf.mxu0
      %1411 = vmatprep.mubr.bf16.mxu0 0
      %1412 = vmatmul.mubr.bf16.gmra.mxu0 %v1269
      %v1413 = vpop.f32.mrf.mxu0
      %v1414 = vadd.f32 0.0, %v1413
      %v1415 = vpop.f32.mrf.mxu0
      %v1416 = vpop.f32.mrf.mxu0
      %v1417 = vadd.f32 0.0, %v1416
      %v1418 = vpop.f32.mrf.mxu0
      %1419 = vmatprep.mubr.bf16.mxu0 0
      %1420 = vmatmul.mubr.bf16.gmra.mxu0 %v1272
      %v1421 = vpop.f32.mrf.mxu0
      %v1422 = vadd.f32 0.0, %v1421
      %v1423 = vpop.f32.mrf.mxu0
      %v1424 = vpop.f32.mrf.mxu0
      %v1425 = vadd.f32 0.0, %v1424
      %v1426 = vpop.f32.mrf.mxu0
      %1427 = vmatprep.mubr.bf16.mxu0 0
      %1428 = vmatmul.mubr.bf16.gmra.mxu0 %v1275
      %v1429 = vpop.f32.mrf.mxu0
      %v1430 = vadd.f32 0.0, %v1429
      %v1431 = vpop.f32.mrf.mxu0
      %v1432 = vpop.f32.mrf.mxu0
      %v1433 = vadd.f32 0.0, %v1432
      %v1434 = vpop.f32.mrf.mxu0
      %1435 = vmatprep.mubr.bf16.mxu0 0
      %1436 = vmatmul.mubr.bf16.gmra.mxu0 %v1278
      %v1437 = vpop.f32.mrf.mxu0
      %v1438 = vadd.f32 0.0, %v1437
      %v1439 = vpop.f32.mrf.mxu0
      %v1440 = vpop.f32.mrf.mxu0
      %v1441 = vadd.f32 0.0, %v1440
      %v1442 = vpop.f32.mrf.mxu0
      %1443 = vdwg.mxu0
      %v1444 = vadd.f32 %v1075, %v1318
      %v1445 = vadd.f32 %v1076, %v1321
      %v1446 = vadd.f32 %v1077, %v1326
      %v1447 = vadd.f32 %v1078, %v1329
      %v1448 = vadd.f32 %v1079, %v1334
      %v1449 = vadd.f32 %v1080, %v1337
      %v1450 = vadd.f32 %v1081, %v1342
      %v1451 = vadd.f32 %v1082, %v1345
      %v1452 = vadd.f32 %v1083, %v1350
      %v1453 = vadd.f32 %v1084, %v1353
      %v1454 = vadd.f32 %v1085, %v1358
      %v1455 = vadd.f32 %v1086, %v1361
      %v1456 = vadd.f32 %v1087, %v1366
      %v1457 = vadd.f32 %v1088, %v1369
      %v1458 = vadd.f32 %v1089, %v1374
      %v1459 = vadd.f32 %v1090, %v1377
      %v1460 = vadd.f32 %v1091, %v1382
      %v1461 = vadd.f32 %v1092, %v1385
      %v1462 = vadd.f32 %v1093, %v1390
      %v1463 = vadd.f32 %v1094, %v1393
      %v1464 = vadd.f32 %v1095, %v1398
      %v1465 = vadd.f32 %v1096, %v1401
      %v1466 = vadd.f32 %v1097, %v1406
      %v1467 = vadd.f32 %v1098, %v1409
      %v1468 = vadd.f32 %v1099, %v1414
      %v1469 = vadd.f32 %v1100, %v1417
      %v1470 = vadd.f32 %v1101, %v1422
      %v1471 = vadd.f32 %v1102, %v1425
      %v1472 = vadd.f32 %v1103, %v1430
      %v1473 = vadd.f32 %v1104, %v1433
      %v1474 = vadd.f32 %v1105, %v1438
      %v1475 = vadd.f32 %v1106, %v1441
      %1476 = vst.msk [vmem:[#allocation2] sm:$0xff] %vm609, %v1444
      %1477 = vst.msk [vmem:[#allocation2 + $0x8] sm:$0xff] %vm609, %v1445
      %1478 = vst.msk [vmem:[#allocation2 + $0x10] sm:$0xff] %vm609, %v1446
      %1479 = vst.msk [vmem:[#allocation2 + $0x18] sm:$0xff] %vm609, %v1447
      %1480 = vst.msk [vmem:[#allocation2 + $0x20] sm:$0xff] %vm609, %v1448
      %1481 = vst.msk [vmem:[#allocation2 + $0x28] sm:$0xff] %vm609, %v1449
      %1482 = vst.msk [vmem:[#allocation2 + $0x30] sm:$0xff] %vm609, %v1450
      %1483 = vst.msk [vmem:[#allocation2 + $0x38] sm:$0xff] %vm609, %v1451
      %1484 = vst.msk [vmem:[#allocation2 + $0x40] sm:$0xff] %vm609, %v1452
      %1485 = vst.msk [vmem:[#allocation2 + $0x48] sm:$0xff] %vm609, %v1453
      %1486 = vst.msk [vmem:[#allocation2 + $0x50] sm:$0xff] %vm609, %v1454
      %1487 = vst.msk [vmem:[#allocation2 + $0x58] sm:$0xff] %vm609, %v1455
      %1488 = vst.msk [vmem:[#allocation2 + $0x60] sm:$0xff] %vm609, %v1456
      %1489 = vst.msk [vmem:[#allocation2 + $0x68] sm:$0xff] %vm609, %v1457
      %1490 = vst.msk [vmem:[#allocation2 + $0x70] sm:$0xff] %vm609, %v1458
      %1491 = vst.msk [vmem:[#allocation2 + $0x78] sm:$0xff] %vm609, %v1459
      %1492 = vst.msk [vmem:[#allocation2 + $0x80] sm:$0xff] %vm609, %v1460
      %1493 = vst.msk [vmem:[#allocation2 + $0x88] sm:$0xff] %vm609, %v1461
      %1494 = vst.msk [vmem:[#allocation2 + $0x90] sm:$0xff] %vm609, %v1462
      %1495 = vst.msk [vmem:[#allocation2 + $0x98] sm:$0xff] %vm609, %v1463
      %1496 = vst.msk [vmem:[#allocation2 + $0xa0] sm:$0xff] %vm609, %v1464
      %1497 = vst.msk [vmem:[#allocation2 + $0xa8] sm:$0xff] %vm609, %v1465
      %1498 = vst.msk [vmem:[#allocation2 + $0xb0] sm:$0xff] %vm609, %v1466
      %1499 = vst.msk [vmem:[#allocation2 + $0xb8] sm:$0xff] %vm609, %v1467
      %1500 = vst.msk [vmem:[#allocation2 + $0xc0] sm:$0xff] %vm609, %v1468
      %1501 = vst.msk [vmem:[#allocation2 + $0xc8] sm:$0xff] %vm609, %v1469
      %1502 = vst.msk [vmem:[#allocation2 + $0xd0] sm:$0xff] %vm609, %v1470
      %1503 = vst.msk [vmem:[#allocation2 + $0xd8] sm:$0xff] %vm609, %v1471
      %1504 = vst.msk [vmem:[#allocation2 + $0xe0] sm:$0xff] %vm609, %v1472
      %1505 = vst.msk [vmem:[#allocation2 + $0xe8] sm:$0xff] %vm609, %v1473
      %1506 = vst.msk [vmem:[#allocation2 + $0xf0] sm:$0xff] %vm609, %v1474
      %1507 = vst.msk [vmem:[#allocation2 + $0xf8] sm:$0xff] %vm609, %v1475
      %v1508 = vld [vmem:[#allocation2] sm:$0xff]
      %v1509 = vld [vmem:[#allocation2 + $0x8] sm:$0xff]
      %v1510 = vld [vmem:[#allocation2 + $0x10] sm:$0xff]
      %v1511 = vld [vmem:[#allocation2 + $0x18] sm:$0xff]
      %v1512 = vld [vmem:[#allocation2 + $0x20] sm:$0xff]
      %v1513 = vld [vmem:[#allocation2 + $0x28] sm:$0xff]
      %v1514 = vld [vmem:[#allocation2 + $0x30] sm:$0xff]
      %v1515 = vld [vmem:[#allocation2 + $0x38] sm:$0xff]
      %v1516 = vld [vmem:[#allocation2 + $0x40] sm:$0xff]
      %v1517 = vld [vmem:[#allocation2 + $0x48] sm:$0xff]
      %v1518 = vld [vmem:[#allocation2 + $0x50] sm:$0xff]
      %v1519 = vld [vmem:[#allocation2 + $0x58] sm:$0xff]
      %v1520 = vld [vmem:[#allocation2 + $0x60] sm:$0xff]
      %v1521 = vld [vmem:[#allocation2 + $0x68] sm:$0xff]
      %v1522 = vld [vmem:[#allocation2 + $0x70] sm:$0xff]
      %v1523 = vld [vmem:[#allocation2 + $0x78] sm:$0xff]
      %v1524 = vld [vmem:[#allocation2 + $0x80] sm:$0xff]
      %v1525 = vld [vmem:[#allocation2 + $0x88] sm:$0xff]
      %v1526 = vld [vmem:[#allocation2 + $0x90] sm:$0xff]
      %v1527 = vld [vmem:[#allocation2 + $0x98] sm:$0xff]
      %v1528 = vld [vmem:[#allocation2 + $0xa0] sm:$0xff]
      %v1529 = vld [vmem:[#allocation2 + $0xa8] sm:$0xff]
      %v1530 = vld [vmem:[#allocation2 + $0xb0] sm:$0xff]
      %v1531 = vld [vmem:[#allocation2 + $0xb8] sm:$0xff]
      %v1532 = vld [vmem:[#allocation2 + $0xc0] sm:$0xff]
      %v1533 = vld [vmem:[#allocation2 + $0xc8] sm:$0xff]
      %v1534 = vld [vmem:[#allocation2 + $0xd0] sm:$0xff]
      %v1535 = vld [vmem:[#allocation2 + $0xd8] sm:$0xff]
      %v1536 = vld [vmem:[#allocation2 + $0xe0] sm:$0xff]
      %v1537 = vld [vmem:[#allocation2 + $0xe8] sm:$0xff]
      %v1538 = vld [vmem:[#allocation2 + $0xf0] sm:$0xff]
      %v1539 = vld [vmem:[#allocation2 + $0xf8] sm:$0xff]
      %v1540 = vld [vmem:[%s253] sm:$0x1]
      %v1542 = vlaneseq
      %v1543 = vshrl.u32 %v1542, 7
      %v1544 = vsub.s32 0, %v1543
      %v1545 = vrot.slane %v1540, %v1544
      %v1547 = vadd.f32 %v1508, %v1545
      %v1548 = vadd.f32 %v1509, %v1545
      %v1549 = vadd.f32 %v1510, %v1545
      %v1550 = vadd.f32 %v1511, %v1545
      %v1551 = vadd.f32 %v1512, %v1545
      %v1552 = vadd.f32 %v1513, %v1545
      %v1553 = vadd.f32 %v1514, %v1545
      %v1554 = vadd.f32 %v1515, %v1545
      %v1555 = vadd.f32 %v1516, %v1545
      %v1556 = vadd.f32 %v1517, %v1545
      %v1557 = vadd.f32 %v1518, %v1545
      %v1558 = vadd.f32 %v1519, %v1545
      %v1559 = vadd.f32 %v1520, %v1545
      %v1560 = vadd.f32 %v1521, %v1545
      %v1561 = vadd.f32 %v1522, %v1545
      %v1562 = vadd.f32 %v1523, %v1545
      %v1563 = vadd.f32 %v1524, %v1545
      %v1564 = vadd.f32 %v1525, %v1545
      %v1565 = vadd.f32 %v1526, %v1545
      %v1566 = vadd.f32 %v1527, %v1545
      %v1567 = vadd.f32 %v1528, %v1545
      %v1568 = vadd.f32 %v1529, %v1545
      %v1569 = vadd.f32 %v1530, %v1545
      %v1570 = vadd.f32 %v1531, %v1545
      %v1571 = vadd.f32 %v1532, %v1545
      %v1572 = vadd.f32 %v1533, %v1545
      %v1573 = vadd.f32 %v1534, %v1545
      %v1574 = vadd.f32 %v1535, %v1545
      %v1575 = vadd.f32 %v1536, %v1545
      %v1576 = vadd.f32 %v1537, %v1545
      %v1577 = vadd.f32 %v1538, %v1545
      %v1578 = vadd.f32 %v1539, %v1545
      %v1579 = vmax.f32 %v1547, 0.0
      %v1580 = vmax.f32 %v1548, 0.0
      %v1581 = vmax.f32 %v1549, 0.0
      %v1582 = vmax.f32 %v1550, 0.0
      %v1583 = vmax.f32 %v1551, 0.0
      %v1584 = vmax.f32 %v1552, 0.0
      %v1585 = vmax.f32 %v1553, 0.0
      %v1586 = vmax.f32 %v1554, 0.0
      %v1587 = vmax.f32 %v1555, 0.0
      %v1588 = vmax.f32 %v1556, 0.0
      %v1589 = vmax.f32 %v1557, 0.0
      %v1590 = vmax.f32 %v1558, 0.0
      %v1591 = vmax.f32 %v1559, 0.0
      %v1592 = vmax.f32 %v1560, 0.0
      %v1593 = vmax.f32 %v1561, 0.0
      %v1594 = vmax.f32 %v1562, 0.0
      %v1595 = vmax.f32 %v1563, 0.0
      %v1596 = vmax.f32 %v1564, 0.0
      %v1597 = vmax.f32 %v1565, 0.0
      %v1598 = vmax.f32 %v1566, 0.0
      %v1599 = vmax.f32 %v1567, 0.0
      %v1600 = vmax.f32 %v1568, 0.0
      %v1601 = vmax.f32 %v1569, 0.0
      %v1602 = vmax.f32 %v1570, 0.0
      %v1603 = vmax.f32 %v1571, 0.0
      %v1604 = vmax.f32 %v1572, 0.0
      %v1605 = vmax.f32 %v1573, 0.0
      %v1606 = vmax.f32 %v1574, 0.0
      %v1607 = vmax.f32 %v1575, 0.0
      %v1608 = vmax.f32 %v1576, 0.0
      %v1609 = vmax.f32 %v1577, 0.0
      %v1610 = vmax.f32 %v1578, 0.0
      %1611 = vst.msk [vmem:[%s261] sm:$0xff] %vm609, %v1579
      %1612 = vst.msk [vmem:[%s261 + $0x8] sm:$0xff] %vm609, %v1580
      %1613 = vst.msk [vmem:[%s261 + $0x10] sm:$0xff] %vm609, %v1581
      %1614 = vst.msk [vmem:[%s261 + $0x18] sm:$0xff] %vm609, %v1582
      %1615 = vst.msk [vmem:[%s261 + $0x20] sm:$0xff] %vm609, %v1583
      %1616 = vst.msk [vmem:[%s261 + $0x28] sm:$0xff] %vm609, %v1584
      %1617 = vst.msk [vmem:[%s261 + $0x30] sm:$0xff] %vm609, %v1585
      %1618 = vst.msk [vmem:[%s261 + $0x38] sm:$0xff] %vm609, %v1586
      %1619 = vst.msk [vmem:[%s261 + $0x40] sm:$0xff] %vm609, %v1587
      %1620 = vst.msk [vmem:[%s261 + $0x48] sm:$0xff] %vm609, %v1588
      %1621 = vst.msk [vmem:[%s261 + $0x50] sm:$0xff] %vm609, %v1589
      %1622 = vst.msk [vmem:[%s261 + $0x58] sm:$0xff] %vm609, %v1590
      %1623 = vst.msk [vmem:[%s261 + $0x60] sm:$0xff] %vm609, %v1591
      %1624 = vst.msk [vmem:[%s261 + $0x68] sm:$0xff] %vm609, %v1592
      %1625 = vst.msk [vmem:[%s261 + $0x70] sm:$0xff] %vm609, %v1593
      %1626 = vst.msk [vmem:[%s261 + $0x78] sm:$0xff] %vm609, %v1594
      %1627 = vst.msk [vmem:[%s261 + $0x80] sm:$0xff] %vm609, %v1595
      %1628 = vst.msk [vmem:[%s261 + $0x88] sm:$0xff] %vm609, %v1596
      %1629 = vst.msk [vmem:[%s261 + $0x90] sm:$0xff] %vm609, %v1597
      %1630 = vst.msk [vmem:[%s261 + $0x98] sm:$0xff] %vm609, %v1598
      %1631 = vst.msk [vmem:[%s261 + $0xa0] sm:$0xff] %vm609, %v1599
      %1632 = vst.msk [vmem:[%s261 + $0xa8] sm:$0xff] %vm609, %v1600
      %1633 = vst.msk [vmem:[%s261 + $0xb0] sm:$0xff] %vm609, %v1601
      %1634 = vst.msk [vmem:[%s261 + $0xb8] sm:$0xff] %vm609, %v1602
      %1635 = vst.msk [vmem:[%s261 + $0xc0] sm:$0xff] %vm609, %v1603
      %1636 = vst.msk [vmem:[%s261 + $0xc8] sm:$0xff] %vm609, %v1604
      %1637 = vst.msk [vmem:[%s261 + $0xd0] sm:$0xff] %vm609, %v1605
      %1638 = vst.msk [vmem:[%s261 + $0xd8] sm:$0xff] %vm609, %v1606
      %1639 = vst.msk [vmem:[%s261 + $0xe0] sm:$0xff] %vm609, %v1607
      %1640 = vst.msk [vmem:[%s261 + $0xe8] sm:$0xff] %vm609, %v1608
      %1641 = vst.msk [vmem:[%s261 + $0xf0] sm:$0xff] %vm609, %v1609
      %1642 = vst.msk [vmem:[%s261 + $0xf8] sm:$0xff] %vm609, %v1610
      %v1643 = vmax.f32 %v1579, %v1581
      %v1644 = vmax.f32 %v1580, %v1582
      %v1645 = vmax.f32 %v1583, %v1585
      %v1646 = vmax.f32 %v1584, %v1586
      %v1647 = vmax.f32 %v1587, %v1589
      %v1648 = vmax.f32 %v1588, %v1590
      %v1649 = vmax.f32 %v1591, %v1593
      %v1650 = vmax.f32 %v1592, %v1594
      %v1651 = vmax.f32 %v1595, %v1597
      %v1652 = vmax.f32 %v1596, %v1598
      %v1653 = vmax.f32 %v1599, %v1601
      %v1654 = vmax.f32 %v1600, %v1602
      %v1655 = vmax.f32 %v1603, %v1605
      %v1656 = vmax.f32 %v1604, %v1606
      %v1657 = vmax.f32 %v1607, %v1609
      %v1658 = vmax.f32 %v1608, %v1610
      %v1675 = vcombine.high %v1643, %v1643
      %v1677 = vunpack.c.l.s4 1983009808
      %v1678 = vunpack.c.0.s8 %v1677
      %v1679 = vlaneseq
      %v1680 = vshrl.u32 %v1679, 7
      %v1681 = vsub.s32 %v1678, %v1680
      %v1682 = vrot.slane %v1643, %v1681
      %v1684 = vunpack.c.l.s4 1983009808
      %v1685 = vunpack.c.0.s8 %v1684
      %v1686 = vlaneseq
      %v1687 = vshrl.u32 %v1686, 7
      %v1688 = vsub.s32 %v1685, %v1687
      %v1689 = vrot.slane %v1675, %v1688
      %v1690 = vcombine.high %v1682, %v1682
      %v1691 = vcombine.high %v1689, %v1689
      %v1692 = vcombine.high %v1644, %v1644
      %v1694 = vunpack.c.l.s4 1983009808
      %v1695 = vunpack.c.0.s8 %v1694
      %v1696 = vlaneseq
      %v1697 = vshrl.u32 %v1696, 7
      %v1698 = vsub.s32 %v1695, %v1697
      %v1699 = vrot.slane %v1644, %v1698
      %v1701 = vunpack.c.l.s4 1983009808
      %v1702 = vunpack.c.0.s8 %v1701
      %v1703 = vlaneseq
      %v1704 = vshrl.u32 %v1703, 7
      %v1705 = vsub.s32 %v1702, %v1704
      %v1706 = vrot.slane %v1692, %v1705
      %v1707 = vcombine.high %v1699, %v1699
      %v1708 = vcombine.high %v1706, %v1706
      %v1709 = vcombine.high %v1645, %v1645
      %v1711 = vunpack.c.l.s4 1983009808
      %v1712 = vunpack.c.0.s8 %v1711
      %v1713 = vlaneseq
      %v1714 = vshrl.u32 %v1713, 7
      %v1715 = vsub.s32 %v1712, %v1714
      %v1716 = vrot.slane %v1645, %v1715
      %v1718 = vunpack.c.l.s4 1983009808
      %v1719 = vunpack.c.0.s8 %v1718
      %v1720 = vlaneseq
      %v1721 = vshrl.u32 %v1720, 7
      %v1722 = vsub.s32 %v1719, %v1721
      %v1723 = vrot.slane %v1709, %v1722
      %v1724 = vcombine.high %v1716, %v1716
      %v1725 = vcombine.high %v1723, %v1723
      %v1726 = vcombine.high %v1646, %v1646
      %v1728 = vunpack.c.l.s4 1983009808
      %v1729 = vunpack.c.0.s8 %v1728
      %v1730 = vlaneseq
      %v1731 = vshrl.u32 %v1730, 7
      %v1732 = vsub.s32 %v1729, %v1731
      %v1733 = vrot.slane %v1646, %v1732
      %v1735 = vunpack.c.l.s4 1983009808
      %v1736 = vunpack.c.0.s8 %v1735
      %v1737 = vlaneseq
      %v1738 = vshrl.u32 %v1737, 7
      %v1739 = vsub.s32 %v1736, %v1738
      %v1740 = vrot.slane %v1726, %v1739
      %v1741 = vcombine.high %v1733, %v1733
      %v1742 = vcombine.high %v1740, %v1740
      %v1743 = vcombine.high %v1647, %v1647
      %v1745 = vunpack.c.l.s4 1983009808
      %v1746 = vunpack.c.0.s8 %v1745
      %v1747 = vlaneseq
      %v1748 = vshrl.u32 %v1747, 7
      %v1749 = vsub.s32 %v1746, %v1748
      %v1750 = vrot.slane %v1647, %v1749
      %v1752 = vunpack.c.l.s4 1983009808
      %v1753 = vunpack.c.0.s8 %v1752
      %v1754 = vlaneseq
      %v1755 = vshrl.u32 %v1754, 7
      %v1756 = vsub.s32 %v1753, %v1755
      %v1757 = vrot.slane %v1743, %v1756
      %v1758 = vcombine.high %v1750, %v1750
      %v1759 = vcombine.high %v1757, %v1757
      %v1760 = vcombine.high %v1648, %v1648
      %v1762 = vunpack.c.l.s4 1983009808
      %v1763 = vunpack.c.0.s8 %v1762
      %v1764 = vlaneseq
      %v1765 = vshrl.u32 %v1764, 7
      %v1766 = vsub.s32 %v1763, %v1765
      %v1767 = vrot.slane %v1648, %v1766
      %v1769 = vunpack.c.l.s4 1983009808
      %v1770 = vunpack.c.0.s8 %v1769
      %v1771 = vlaneseq
      %v1772 = vshrl.u32 %v1771, 7
      %v1773 = vsub.s32 %v1770, %v1772
      %v1774 = vrot.slane %v1760, %v1773
      %v1775 = vcombine.high %v1767, %v1767
      %v1776 = vcombine.high %v1774, %v1774
      %v1777 = vcombine.high %v1649, %v1649
      %v1779 = vunpack.c.l.s4 1983009808
      %v1780 = vunpack.c.0.s8 %v1779
      %v1781 = vlaneseq
      %v1782 = vshrl.u32 %v1781, 7
      %v1783 = vsub.s32 %v1780, %v1782
      %v1784 = vrot.slane %v1649, %v1783
      %v1786 = vunpack.c.l.s4 1983009808
      %v1787 = vunpack.c.0.s8 %v1786
      %v1788 = vlaneseq
      %v1789 = vshrl.u32 %v1788, 7
      %v1790 = vsub.s32 %v1787, %v1789
      %v1791 = vrot.slane %v1777, %v1790
      %v1792 = vcombine.high %v1784, %v1784
      %v1793 = vcombine.high %v1791, %v1791
      %v1794 = vcombine.high %v1650, %v1650
      %v1796 = vunpack.c.l.s4 1983009808
      %v1797 = vunpack.c.0.s8 %v1796
      %v1798 = vlaneseq
      %v1799 = vshrl.u32 %v1798, 7
      %v1800 = vsub.s32 %v1797, %v1799
      %v1801 = vrot.slane %v1650, %v1800
      %v1803 = vunpack.c.l.s4 1983009808
      %v1804 = vunpack.c.0.s8 %v1803
      %v1805 = vlaneseq
      %v1806 = vshrl.u32 %v1805, 7
      %v1807 = vsub.s32 %v1804, %v1806
      %v1808 = vrot.slane %v1794, %v1807
      %v1809 = vcombine.high %v1801, %v1801
      %v1810 = vcombine.high %v1808, %v1808
      %v1811 = vcombine.high %v1651, %v1651
      %v1813 = vunpack.c.l.s4 1983009808
      %v1814 = vunpack.c.0.s8 %v1813
      %v1815 = vlaneseq
      %v1816 = vshrl.u32 %v1815, 7
      %v1817 = vsub.s32 %v1814, %v1816
      %v1818 = vrot.slane %v1651, %v1817
      %v1820 = vunpack.c.l.s4 1983009808
      %v1821 = vunpack.c.0.s8 %v1820
      %v1822 = vlaneseq
      %v1823 = vshrl.u32 %v1822, 7
      %v1824 = vsub.s32 %v1821, %v1823
      %v1825 = vrot.slane %v1811, %v1824
      %v1826 = vcombine.high %v1818, %v1818
      %v1827 = vcombine.high %v1825, %v1825
      %v1828 = vcombine.high %v1652, %v1652
      %v1830 = vunpack.c.l.s4 1983009808
      %v1831 = vunpack.c.0.s8 %v1830
      %v1832 = vlaneseq
      %v1833 = vshrl.u32 %v1832, 7
      %v1834 = vsub.s32 %v1831, %v1833
      %v1835 = vrot.slane %v1652, %v1834
      %v1837 = vunpack.c.l.s4 1983009808
      %v1838 = vunpack.c.0.s8 %v1837
      %v1839 = vlaneseq
      %v1840 = vshrl.u32 %v1839, 7
      %v1841 = vsub.s32 %v1838, %v1840
      %v1842 = vrot.slane %v1828, %v1841
      %v1843 = vcombine.high %v1835, %v1835
      %v1844 = vcombine.high %v1842, %v1842
      %v1845 = vcombine.high %v1653, %v1653
      %v1847 = vunpack.c.l.s4 1983009808
      %v1848 = vunpack.c.0.s8 %v1847
      %v1849 = vlaneseq
      %v1850 = vshrl.u32 %v1849, 7
      %v1851 = vsub.s32 %v1848, %v1850
      %v1852 = vrot.slane %v1653, %v1851
      %v1854 = vunpack.c.l.s4 1983009808
      %v1855 = vunpack.c.0.s8 %v1854
      %v1856 = vlaneseq
      %v1857 = vshrl.u32 %v1856, 7
      %v1858 = vsub.s32 %v1855, %v1857
      %v1859 = vrot.slane %v1845, %v1858
      %v1860 = vcombine.high %v1852, %v1852
      %v1861 = vcombine.high %v1859, %v1859
      %v1862 = vcombine.high %v1654, %v1654
      %v1864 = vunpack.c.l.s4 1983009808
      %v1865 = vunpack.c.0.s8 %v1864
      %v1866 = vlaneseq
      %v1867 = vshrl.u32 %v1866, 7
      %v1868 = vsub.s32 %v1865, %v1867
      %v1869 = vrot.slane %v1654, %v1868
      %v1871 = vunpack.c.l.s4 1983009808
      %v1872 = vunpack.c.0.s8 %v1871
      %v1873 = vlaneseq
      %v1874 = vshrl.u32 %v1873, 7
      %v1875 = vsub.s32 %v1872, %v1874
      %v1876 = vrot.slane %v1862, %v1875
      %v1877 = vcombine.high %v1869, %v1869
      %v1878 = vcombine.high %v1876, %v1876
      %v1879 = vcombine.high %v1655, %v1655
      %v1881 = vunpack.c.l.s4 1983009808
      %v1882 = vunpack.c.0.s8 %v1881
      %v1883 = vlaneseq
      %v1884 = vshrl.u32 %v1883, 7
      %v1885 = vsub.s32 %v1882, %v1884
      %v1886 = vrot.slane %v1655, %v1885
      %v1888 = vunpack.c.l.s4 1983009808
      %v1889 = vunpack.c.0.s8 %v1888
      %v1890 = vlaneseq
      %v1891 = vshrl.u32 %v1890, 7
      %v1892 = vsub.s32 %v1889, %v1891
      %v1893 = vrot.slane %v1879, %v1892
      %v1894 = vcombine.high %v1886, %v1886
      %v1895 = vcombine.high %v1893, %v1893
      %v1896 = vcombine.high %v1656, %v1656
      %v1898 = vunpack.c.l.s4 1983009808
      %v1899 = vunpack.c.0.s8 %v1898
      %v1900 = vlaneseq
      %v1901 = vshrl.u32 %v1900, 7
      %v1902 = vsub.s32 %v1899, %v1901
      %v1903 = vrot.slane %v1656, %v1902
      %v1905 = vunpack.c.l.s4 1983009808
      %v1906 = vunpack.c.0.s8 %v1905
      %v1907 = vlaneseq
      %v1908 = vshrl.u32 %v1907, 7
      %v1909 = vsub.s32 %v1906, %v1908
      %v1910 = vrot.slane %v1896, %v1909
      %v1911 = vcombine.high %v1903, %v1903
      %v1912 = vcombine.high %v1910, %v1910
      %v1913 = vcombine.high %v1657, %v1657
      %v1915 = vunpack.c.l.s4 1983009808
      %v1916 = vunpack.c.0.s8 %v1915
      %v1917 = vlaneseq
      %v1918 = vshrl.u32 %v1917, 7
      %v1919 = vsub.s32 %v1916, %v1918
      %v1920 = vrot.slane %v1657, %v1919
      %v1922 = vunpack.c.l.s4 1983009808
      %v1923 = vunpack.c.0.s8 %v1922
      %v1924 = vlaneseq
      %v1925 = vshrl.u32 %v1924, 7
      %v1926 = vsub.s32 %v1923, %v1925
      %v1927 = vrot.slane %v1913, %v1926
      %v1928 = vcombine.high %v1920, %v1920
      %v1929 = vcombine.high %v1927, %v1927
      %v1930 = vcombine.high %v1658, %v1658
      %v1932 = vunpack.c.l.s4 1983009808
      %v1933 = vunpack.c.0.s8 %v1932
      %v1934 = vlaneseq
      %v1935 = vshrl.u32 %v1934, 7
      %v1936 = vsub.s32 %v1933, %v1935
      %v1937 = vrot.slane %v1658, %v1936
      %v1939 = vunpack.c.l.s4 1983009808
      %v1940 = vunpack.c.0.s8 %v1939
      %v1941 = vlaneseq
      %v1942 = vshrl.u32 %v1941, 7
      %v1943 = vsub.s32 %v1940, %v1942
      %v1944 = vrot.slane %v1930, %v1943
      %v1945 = vcombine.high %v1937, %v1937
      %v1946 = vcombine.high %v1944, %v1944
      %v2011 = vrot.slane %v1682, 7
      %v2012 = vrot.slane %v2011, 2
      %v2013 = vrot.slane %v1690, 7
      %v2014 = vrot.slane %v2013, 2
      %v2015 = vrot.slane %v1689, 7
      %v2016 = vrot.slane %v2015, 2
      %v2017 = vrot.slane %v1691, 7
      %v2018 = vrot.slane %v2017, 2
      %v2019 = vrot.slane %v1699, 7
      %v2020 = vrot.slane %v2019, 2
      %v2021 = vrot.slane %v1707, 7
      %v2022 = vrot.slane %v2021, 2
      %v2023 = vrot.slane %v1706, 7
      %v2024 = vrot.slane %v2023, 2
      %v2025 = vrot.slane %v1708, 7
      %v2026 = vrot.slane %v2025, 2
      %v2027 = vrot.slane %v1716, 7
      %v2028 = vrot.slane %v2027, 2
      %v2029 = vrot.slane %v1724, 7
      %v2030 = vrot.slane %v2029, 2
      %v2031 = vrot.slane %v1723, 7
      %v2032 = vrot.slane %v2031, 2
      %v2033 = vrot.slane %v1725, 7
      %v2034 = vrot.slane %v2033, 2
      %v2035 = vrot.slane %v1733, 7
      %v2036 = vrot.slane %v2035, 2
      %v2037 = vrot.slane %v1741, 7
      %v2038 = vrot.slane %v2037, 2
      %v2039 = vrot.slane %v1740, 7
      %v2040 = vrot.slane %v2039, 2
      %v2041 = vrot.slane %v1742, 7
      %v2042 = vrot.slane %v2041, 2
      %v2043 = vrot.slane %v1750, 7
      %v2044 = vrot.slane %v2043, 2
      %v2045 = vrot.slane %v1758, 7
      %v2046 = vrot.slane %v2045, 2
      %v2047 = vrot.slane %v1757, 7
      %v2048 = vrot.slane %v2047, 2
      %v2049 = vrot.slane %v1759, 7
      %v2050 = vrot.slane %v2049, 2
      %v2051 = vrot.slane %v1767, 7
      %v2052 = vrot.slane %v2051, 2
      %v2053 = vrot.slane %v1775, 7
      %v2054 = vrot.slane %v2053, 2
      %v2055 = vrot.slane %v1774, 7
      %v2056 = vrot.slane %v2055, 2
      %v2057 = vrot.slane %v1776, 7
      %v2058 = vrot.slane %v2057, 2
      %v2059 = vrot.slane %v1784, 7
      %v2060 = vrot.slane %v2059, 2
      %v2061 = vrot.slane %v1792, 7
      %v2062 = vrot.slane %v2061, 2
      %v2063 = vrot.slane %v1791, 7
      %v2064 = vrot.slane %v2063, 2
      %v2065 = vrot.slane %v1793, 7
      %v2066 = vrot.slane %v2065, 2
      %v2067 = vrot.slane %v1801, 7
      %v2068 = vrot.slane %v2067, 2
      %v2069 = vrot.slane %v1809, 7
      %v2070 = vrot.slane %v2069, 2
      %v2071 = vrot.slane %v1808, 7
      %v2072 = vrot.slane %v2071, 2
      %v2073 = vrot.slane %v1810, 7
      %v2074 = vrot.slane %v2073, 2
      %v2075 = vrot.slane %v1818, 7
      %v2076 = vrot.slane %v2075, 2
      %v2077 = vrot.slane %v1826, 7
      %v2078 = vrot.slane %v2077, 2
      %v2079 = vrot.slane %v1825, 7
      %v2080 = vrot.slane %v2079, 2
      %v2081 = vrot.slane %v1827, 7
      %v2082 = vrot.slane %v2081, 2
      %v2083 = vrot.slane %v1835, 7
      %v2084 = vrot.slane %v2083, 2
      %v2085 = vrot.slane %v1843, 7
      %v2086 = vrot.slane %v2085, 2
      %v2087 = vrot.slane %v1842, 7
      %v2088 = vrot.slane %v2087, 2
      %v2089 = vrot.slane %v1844, 7
      %v2090 = vrot.slane %v2089, 2
      %v2091 = vrot.slane %v1852, 7
      %v2092 = vrot.slane %v2091, 2
      %v2093 = vrot.slane %v1860, 7
      %v2094 = vrot.slane %v2093, 2
      %v2095 = vrot.slane %v1859, 7
      %v2096 = vrot.slane %v2095, 2
      %v2097 = vrot.slane %v1861, 7
      %v2098 = vrot.slane %v2097, 2
      %v2099 = vrot.slane %v1869, 7
      %v2100 = vrot.slane %v2099, 2
      %v2101 = vrot.slane %v1877, 7
      %v2102 = vrot.slane %v2101, 2
      %v2103 = vrot.slane %v1876, 7
      %v2104 = vrot.slane %v2103, 2
      %v2105 = vrot.slane %v1878, 7
      %v2106 = vrot.slane %v2105, 2
      %v2107 = vrot.slane %v1886, 7
      %v2108 = vrot.slane %v2107, 2
      %v2109 = vrot.slane %v1894, 7
      %v2110 = vrot.slane %v2109, 2
      %v2111 = vrot.slane %v1893, 7
      %v2112 = vrot.slane %v2111, 2
      %v2113 = vrot.slane %v1895, 7
      %v2114 = vrot.slane %v2113, 2
      %v2115 = vrot.slane %v1903, 7
      %v2116 = vrot.slane %v2115, 2
      %v2117 = vrot.slane %v1911, 7
      %v2118 = vrot.slane %v2117, 2
      %v2119 = vrot.slane %v1910, 7
      %v2120 = vrot.slane %v2119, 2
      %v2121 = vrot.slane %v1912, 7
      %v2122 = vrot.slane %v2121, 2
      %v2123 = vrot.slane %v1920, 7
      %v2124 = vrot.slane %v2123, 2
      %v2125 = vrot.slane %v1928, 7
      %v2126 = vrot.slane %v2125, 2
      %v2127 = vrot.slane %v1927, 7
      %v2128 = vrot.slane %v2127, 2
      %v2129 = vrot.slane %v1929, 7
      %v2130 = vrot.slane %v2129, 2
      %v2131 = vrot.slane %v1937, 7
      %v2132 = vrot.slane %v2131, 2
      %v2133 = vrot.slane %v1945, 7
      %v2134 = vrot.slane %v2133, 2
      %v2135 = vrot.slane %v1944, 7
      %v2136 = vrot.slane %v2135, 2
      %v2137 = vrot.slane %v1946, 7
      %v2138 = vrot.slane %v2137, 2
      %v2203 = vmax.f32 %v1682, %v2012
      %v2204 = vmax.f32 %v1690, %v2014
      %v2205 = vmax.f32 %v1689, %v2016
      %v2206 = vmax.f32 %v1691, %v2018
      %v2207 = vmax.f32 %v1699, %v2020
      %v2208 = vmax.f32 %v1707, %v2022
      %v2209 = vmax.f32 %v1706, %v2024
      %v2210 = vmax.f32 %v1708, %v2026
      %v2211 = vmax.f32 %v1716, %v2028
      %v2212 = vmax.f32 %v1724, %v2030
      %v2213 = vmax.f32 %v1723, %v2032
      %v2214 = vmax.f32 %v1725, %v2034
      %v2215 = vmax.f32 %v1733, %v2036
      %v2216 = vmax.f32 %v1741, %v2038
      %v2217 = vmax.f32 %v1740, %v2040
      %v2218 = vmax.f32 %v1742, %v2042
      %v2219 = vmax.f32 %v1750, %v2044
      %v2220 = vmax.f32 %v1758, %v2046
      %v2221 = vmax.f32 %v1757, %v2048
      %v2222 = vmax.f32 %v1759, %v2050
      %v2223 = vmax.f32 %v1767, %v2052
      %v2224 = vmax.f32 %v1775, %v2054
      %v2225 = vmax.f32 %v1774, %v2056
      %v2226 = vmax.f32 %v1776, %v2058
      %v2227 = vmax.f32 %v1784, %v2060
      %v2228 = vmax.f32 %v1792, %v2062
      %v2229 = vmax.f32 %v1791, %v2064
      %v2230 = vmax.f32 %v1793, %v2066
      %v2231 = vmax.f32 %v1801, %v2068
      %v2232 = vmax.f32 %v1809, %v2070
      %v2233 = vmax.f32 %v1808, %v2072
      %v2234 = vmax.f32 %v1810, %v2074
      %v2235 = vmax.f32 %v1818, %v2076
      %v2236 = vmax.f32 %v1826, %v2078
      %v2237 = vmax.f32 %v1825, %v2080
      %v2238 = vmax.f32 %v1827, %v2082
      %v2239 = vmax.f32 %v1835, %v2084
      %v2240 = vmax.f32 %v1843, %v2086
      %v2241 = vmax.f32 %v1842, %v2088
      %v2242 = vmax.f32 %v1844, %v2090
      %v2243 = vmax.f32 %v1852, %v2092
      %v2244 = vmax.f32 %v1860, %v2094
      %v2245 = vmax.f32 %v1859, %v2096
      %v2246 = vmax.f32 %v1861, %v2098
      %v2247 = vmax.f32 %v1869, %v2100
      %v2248 = vmax.f32 %v1877, %v2102
      %v2249 = vmax.f32 %v1876, %v2104
      %v2250 = vmax.f32 %v1878, %v2106
      %v2251 = vmax.f32 %v1886, %v2108
      %v2252 = vmax.f32 %v1894, %v2110
      %v2253 = vmax.f32 %v1893, %v2112
      %v2254 = vmax.f32 %v1895, %v2114
      %v2255 = vmax.f32 %v1903, %v2116
      %v2256 = vmax.f32 %v1911, %v2118
      %v2257 = vmax.f32 %v1910, %v2120
      %v2258 = vmax.f32 %v1912, %v2122
      %v2259 = vmax.f32 %v1920, %v2124
      %v2260 = vmax.f32 %v1928, %v2126
      %v2261 = vmax.f32 %v1927, %v2128
      %v2262 = vmax.f32 %v1929, %v2130
      %v2263 = vmax.f32 %v1937, %v2132
      %v2264 = vmax.f32 %v1945, %v2134
      %v2265 = vmax.f32 %v1944, %v2136
      %v2266 = vmax.f32 %v1946, %v2138
      %v2267 = vpack.c.bf16 %v2203, %v2203
      %v2268 = vpack.c.bf16 %v2204, %v2204
      %v2269 = vpack.c.bf16 %v2205, %v2205
      %v2270 = vpack.c.bf16 %v2206, %v2206
      %v2271 = vpack.c.bf16 %v2207, %v2207
      %v2272 = vpack.c.bf16 %v2208, %v2208
      %v2273 = vpack.c.bf16 %v2209, %v2209
      %v2274 = vpack.c.bf16 %v2210, %v2210
      %v2275 = vpack.c.bf16 %v2211, %v2211
      %v2276 = vpack.c.bf16 %v2212, %v2212
      %v2277 = vpack.c.bf16 %v2213, %v2213
      %v2278 = vpack.c.bf16 %v2214, %v2214
      %v2279 = vpack.c.bf16 %v2215, %v2215
      %v2280 = vpack.c.bf16 %v2216, %v2216
      %v2281 = vpack.c.bf16 %v2217, %v2217
      %v2282 = vpack.c.bf16 %v2218, %v2218
      %v2283 = vpack.c.bf16 %v2219, %v2219
      %v2284 = vpack.c.bf16 %v2220, %v2220
      %v2285 = vpack.c.bf16 %v2221, %v2221
      %v2286 = vpack.c.bf16 %v2222, %v2222
      %v2287 = vpack.c.bf16 %v2223, %v2223
      %v2288 = vpack.c.bf16 %v2224, %v2224
      %v2289 = vpack.c.bf16 %v2225, %v2225
      %v2290 = vpack.c.bf16 %v2226, %v2226
      %v2291 = vpack.c.bf16 %v2227, %v2227
      %v2292 = vpack.c.bf16 %v2228, %v2228
      %v2293 = vpack.c.bf16 %v2229, %v2229
      %v2294 = vpack.c.bf16 %v2230, %v2230
      %v2295 = vpack.c.bf16 %v2231, %v2231
      %v2296 = vpack.c.bf16 %v2232, %v2232
      %v2297 = vpack.c.bf16 %v2233, %v2233
      %v2298 = vpack.c.bf16 %v2234, %v2234
      %v2299 = vpack.c.bf16 %v2235, %v2235
      %v2300 = vpack.c.bf16 %v2236, %v2236
      %v2301 = vpack.c.bf16 %v2237, %v2237
      %v2302 = vpack.c.bf16 %v2238, %v2238
      %v2303 = vpack.c.bf16 %v2239, %v2239
      %v2304 = vpack.c.bf16 %v2240, %v2240
      %v2305 = vpack.c.bf16 %v2241, %v2241
      %v2306 = vpack.c.bf16 %v2242, %v2242
      %v2307 = vpack.c.bf16 %v2243, %v2243
      %v2308 = vpack.c.bf16 %v2244, %v2244
      %v2309 = vpack.c.bf16 %v2245, %v2245
      %v2310 = vpack.c.bf16 %v2246, %v2246
      %v2311 = vpack.c.bf16 %v2247, %v2247
      %v2312 = vpack.c.bf16 %v2248, %v2248
      %v2313 = vpack.c.bf16 %v2249, %v2249
      %v2314 = vpack.c.bf16 %v2250, %v2250
      %v2315 = vpack.c.bf16 %v2251, %v2251
      %v2316 = vpack.c.bf16 %v2252, %v2252
      %v2317 = vpack.c.bf16 %v2253, %v2253
      %v2318 = vpack.c.bf16 %v2254, %v2254
      %v2319 = vpack.c.bf16 %v2255, %v2255
      %v2320 = vpack.c.bf16 %v2256, %v2256
      %v2321 = vpack.c.bf16 %v2257, %v2257
      %v2322 = vpack.c.bf16 %v2258, %v2258
      %v2323 = vpack.c.bf16 %v2259, %v2259
      %v2324 = vpack.c.bf16 %v2260, %v2260
      %v2325 = vpack.c.bf16 %v2261, %v2261
      %v2326 = vpack.c.bf16 %v2262, %v2262
      %v2327 = vpack.c.bf16 %v2263, %v2263
      %v2328 = vpack.c.bf16 %v2264, %v2264
      %v2329 = vpack.c.bf16 %v2265, %v2265
      %v2330 = vpack.c.bf16 %v2266, %v2266
      %v2395 = vunpack.c.l.b16 %v2267
      %v2396 = vunpack.c.l.b16 %v2268
      %v2397 = vunpack.c.l.b16 %v2269
      %v2398 = vunpack.c.l.b16 %v2270
      %v2399 = vunpack.c.l.b16 %v2271
      %v2400 = vunpack.c.l.b16 %v2272
      %v2401 = vunpack.c.l.b16 %v2273
      %v2402 = vunpack.c.l.b16 %v2274
      %v2403 = vunpack.c.l.b16 %v2275
      %v2404 = vunpack.c.l.b16 %v2276
      %v2405 = vunpack.c.l.b16 %v2277
      %v2406 = vunpack.c.l.b16 %v2278
      %v2407 = vunpack.c.l.b16 %v2279
      %v2408 = vunpack.c.l.b16 %v2280
      %v2409 = vunpack.c.l.b16 %v2281
      %v2410 = vunpack.c.l.b16 %v2282
      %v2411 = vunpack.c.l.b16 %v2283
      %v2412 = vunpack.c.l.b16 %v2284
      %v2413 = vunpack.c.l.b16 %v2285
      %v2414 = vunpack.c.l.b16 %v2286
      %v2415 = vunpack.c.l.b16 %v2287
      %v2416 = vunpack.c.l.b16 %v2288
      %v2417 = vunpack.c.l.b16 %v2289
      %v2418 = vunpack.c.l.b16 %v2290
      %v2419 = vunpack.c.l.b16 %v2291
      %v2420 = vunpack.c.l.b16 %v2292
      %v2421 = vunpack.c.l.b16 %v2293
      %v2422 = vunpack.c.l.b16 %v2294
      %v2423 = vunpack.c.l.b16 %v2295
      %v2424 = vunpack.c.l.b16 %v2296
      %v2425 = vunpack.c.l.b16 %v2297
      %v2426 = vunpack.c.l.b16 %v2298
      %v2427 = vunpack.c.l.b16 %v2299
      %v2428 = vunpack.c.l.b16 %v2300
      %v2429 = vunpack.c.l.b16 %v2301
      %v2430 = vunpack.c.l.b16 %v2302
      %v2431 = vunpack.c.l.b16 %v2303
      %v2432 = vunpack.c.l.b16 %v2304
      %v2433 = vunpack.c.l.b16 %v2305
      %v2434 = vunpack.c.l.b16 %v2306
      %v2435 = vunpack.c.l.b16 %v2307
      %v2436 = vunpack.c.l.b16 %v2308
      %v2437 = vunpack.c.l.b16 %v2309
      %v2438 = vunpack.c.l.b16 %v2310
      %v2439 = vunpack.c.l.b16 %v2311
      %v2440 = vunpack.c.l.b16 %v2312
      %v2441 = vunpack.c.l.b16 %v2313
      %v2442 = vunpack.c.l.b16 %v2314
      %v2443 = vunpack.c.l.b16 %v2315
      %v2444 = vunpack.c.l.b16 %v2316
      %v2445 = vunpack.c.l.b16 %v2317
      %v2446 = vunpack.c.l.b16 %v2318
      %v2447 = vunpack.c.l.b16 %v2319
      %v2448 = vunpack.c.l.b16 %v2320
      %v2449 = vunpack.c.l.b16 %v2321
      %v2450 = vunpack.c.l.b16 %v2322
      %v2451 = vunpack.c.l.b16 %v2323
      %v2452 = vunpack.c.l.b16 %v2324
      %v2453 = vunpack.c.l.b16 %v2325
      %v2454 = vunpack.c.l.b16 %v2326
      %v2455 = vunpack.c.l.b16 %v2327
      %v2456 = vunpack.c.l.b16 %v2328
      %v2457 = vunpack.c.l.b16 %v2329
      %v2458 = vunpack.c.l.b16 %v2330
      %v2459 = vpack.c.b16 %v2395, %v2395
      %v2460 = vpack.c.b16 %v2396, %v2396
      %v2461 = vpack.c.b16 %v2397, %v2397
      %v2462 = vpack.c.b16 %v2398, %v2398
      %v2463 = vpack.c.b16 %v2399, %v2399
      %v2464 = vpack.c.b16 %v2400, %v2400
      %v2465 = vpack.c.b16 %v2401, %v2401
      %v2466 = vpack.c.b16 %v2402, %v2402
      %v2467 = vpack.c.b16 %v2403, %v2403
      %v2468 = vpack.c.b16 %v2404, %v2404
      %v2469 = vpack.c.b16 %v2405, %v2405
      %v2470 = vpack.c.b16 %v2406, %v2406
      %v2471 = vpack.c.b16 %v2407, %v2407
      %v2472 = vpack.c.b16 %v2408, %v2408
      %v2473 = vpack.c.b16 %v2409, %v2409
      %v2474 = vpack.c.b16 %v2410, %v2410
      %v2475 = vpack.c.b16 %v2411, %v2411
      %v2476 = vpack.c.b16 %v2412, %v2412
      %v2477 = vpack.c.b16 %v2413, %v2413
      %v2478 = vpack.c.b16 %v2414, %v2414
      %v2479 = vpack.c.b16 %v2415, %v2415
      %v2480 = vpack.c.b16 %v2416, %v2416
      %v2481 = vpack.c.b16 %v2417, %v2417
      %v2482 = vpack.c.b16 %v2418, %v2418
      %v2483 = vpack.c.b16 %v2419, %v2419
      %v2484 = vpack.c.b16 %v2420, %v2420
      %v2485 = vpack.c.b16 %v2421, %v2421
      %v2486 = vpack.c.b16 %v2422, %v2422
      %v2487 = vpack.c.b16 %v2423, %v2423
      %v2488 = vpack.c.b16 %v2424, %v2424
      %v2489 = vpack.c.b16 %v2425, %v2425
      %v2490 = vpack.c.b16 %v2426, %v2426
      %v2491 = vpack.c.b16 %v2427, %v2427
      %v2492 = vpack.c.b16 %v2428, %v2428
      %v2493 = vpack.c.b16 %v2429, %v2429
      %v2494 = vpack.c.b16 %v2430, %v2430
      %v2495 = vpack.c.b16 %v2431, %v2431
      %v2496 = vpack.c.b16 %v2432, %v2432
      %v2497 = vpack.c.b16 %v2433, %v2433
      %v2498 = vpack.c.b16 %v2434, %v2434
      %v2499 = vpack.c.b16 %v2435, %v2435
      %v2500 = vpack.c.b16 %v2436, %v2436
      %v2501 = vpack.c.b16 %v2437, %v2437
      %v2502 = vpack.c.b16 %v2438, %v2438
      %v2503 = vpack.c.b16 %v2439, %v2439
      %v2504 = vpack.c.b16 %v2440, %v2440
      %v2505 = vpack.c.b16 %v2441, %v2441
      %v2506 = vpack.c.b16 %v2442, %v2442
      %v2507 = vpack.c.b16 %v2443, %v2443
      %v2508 = vpack.c.b16 %v2444, %v2444
      %v2509 = vpack.c.b16 %v2445, %v2445
      %v2510 = vpack.c.b16 %v2446, %v2446
      %v2511 = vpack.c.b16 %v2447, %v2447
      %v2512 = vpack.c.b16 %v2448, %v2448
      %v2513 = vpack.c.b16 %v2449, %v2449
      %v2514 = vpack.c.b16 %v2450, %v2450
      %v2515 = vpack.c.b16 %v2451, %v2451
      %v2516 = vpack.c.b16 %v2452, %v2452
      %v2517 = vpack.c.b16 %v2453, %v2453
      %v2518 = vpack.c.b16 %v2454, %v2454
      %v2519 = vpack.c.b16 %v2455, %v2455
      %v2520 = vpack.c.b16 %v2456, %v2456
      %v2521 = vpack.c.b16 %v2457, %v2457
      %v2522 = vpack.c.b16 %v2458, %v2458
      %v2523 = vunpack.c.l.b16 %v2459
      %v2524 = vunpack.c.l.b16 %v2460
      %v2525 = vunpack.c.l.b16 %v2461
      %v2526 = vunpack.c.l.b16 %v2462
      %v2527 = vunpack.c.l.b16 %v2463
      %v2528 = vunpack.c.l.b16 %v2464
      %v2529 = vunpack.c.l.b16 %v2465
      %v2530 = vunpack.c.l.b16 %v2466
      %v2531 = vunpack.c.l.b16 %v2467
      %v2532 = vunpack.c.l.b16 %v2468
      %v2533 = vunpack.c.l.b16 %v2469
      %v2534 = vunpack.c.l.b16 %v2470
      %v2535 = vunpack.c.l.b16 %v2471
      %v2536 = vunpack.c.l.b16 %v2472
      %v2537 = vunpack.c.l.b16 %v2473
      %v2538 = vunpack.c.l.b16 %v2474
      %v2539 = vunpack.c.l.b16 %v2475
      %v2540 = vunpack.c.l.b16 %v2476
      %v2541 = vunpack.c.l.b16 %v2477
      %v2542 = vunpack.c.l.b16 %v2478
      %v2543 = vunpack.c.l.b16 %v2479
      %v2544 = vunpack.c.l.b16 %v2480
      %v2545 = vunpack.c.l.b16 %v2481
      %v2546 = vunpack.c.l.b16 %v2482
      %v2547 = vunpack.c.l.b16 %v2483
      %v2548 = vunpack.c.l.b16 %v2484
      %v2549 = vunpack.c.l.b16 %v2485
      %v2550 = vunpack.c.l.b16 %v2486
      %v2551 = vunpack.c.l.b16 %v2487
      %v2552 = vunpack.c.l.b16 %v2488
      %v2553 = vunpack.c.l.b16 %v2489
      %v2554 = vunpack.c.l.b16 %v2490
      %v2555 = vunpack.c.l.b16 %v2491
      %v2556 = vunpack.c.l.b16 %v2492
      %v2557 = vunpack.c.l.b16 %v2493
      %v2558 = vunpack.c.l.b16 %v2494
      %v2559 = vunpack.c.l.b16 %v2495
      %v2560 = vunpack.c.l.b16 %v2496
      %v2561 = vunpack.c.l.b16 %v2497
      %v2562 = vunpack.c.l.b16 %v2498
      %v2563 = vunpack.c.l.b16 %v2499
      %v2564 = vunpack.c.l.b16 %v2500
      %v2565 = vunpack.c.l.b16 %v2501
      %v2566 = vunpack.c.l.b16 %v2502
      %v2567 = vunpack.c.l.b16 %v2503
      %v2568 = vunpack.c.l.b16 %v2504
      %v2569 = vunpack.c.l.b16 %v2505
      %v2570 = vunpack.c.l.b16 %v2506
      %v2571 = vunpack.c.l.b16 %v2507
      %v2572 = vunpack.c.l.b16 %v2508
      %v2573 = vunpack.c.l.b16 %v2509
      %v2574 = vunpack.c.l.b16 %v2510
      %v2575 = vunpack.c.l.b16 %v2511
      %v2576 = vunpack.c.l.b16 %v2512
      %v2577 = vunpack.c.l.b16 %v2513
      %v2578 = vunpack.c.l.b16 %v2514
      %v2579 = vunpack.c.l.b16 %v2515
      %v2580 = vunpack.c.l.b16 %v2516
      %v2581 = vunpack.c.l.b16 %v2517
      %v2582 = vunpack.c.l.b16 %v2518
      %v2583 = vunpack.c.l.b16 %v2519
      %v2584 = vunpack.c.l.b16 %v2520
      %v2585 = vunpack.c.l.b16 %v2521
      %v2586 = vunpack.c.l.b16 %v2522
      %v2587 = vrot.slane %v2524, 7
      %vm2588 = vcmask 1041409
      %v2589 = vsel %vm2588, %v2587, %v2523
      %v2590 = vrot.slane %v2525, 6
      %vm2591 = vcmask 1042434
      %v2592 = vsel %vm2591, %v2590, %v2589
      %v2593 = vrot.slane %v2526, 5
      %vm2594 = vcmask 1043459
      %v2595 = vsel %vm2594, %v2593, %v2592
      %v2596 = vrot.slane %v2527, 4
      %vm2597 = vcmask 1044484
      %v2598 = vsel %vm2597, %v2596, %v2595
      %v2599 = vrot.slane %v2528, 3
      %vm2600 = vcmask 1045509
      %v2601 = vsel %vm2600, %v2599, %v2598
      %v2602 = vrot.slane %v2529, 2
      %vm2603 = vcmask 1046534
      %v2604 = vsel %vm2603, %v2602, %v2601
      %v2605 = vrot.slane %v2530, 1
      %vm2606 = vcmask 1047559
      %v2607 = vsel %vm2606, %v2605, %v2604
      %v2608 = vrot.slane %v2532, 7
      %v2609 = vsel %vm2588, %v2608, %v2531
      %v2610 = vrot.slane %v2533, 6
      %v2611 = vsel %vm2591, %v2610, %v2609
      %v2612 = vrot.slane %v2534, 5
      %v2613 = vsel %vm2594, %v2612, %v2611
      %v2614 = vrot.slane %v2535, 4
      %v2615 = vsel %vm2597, %v2614, %v2613
      %v2616 = vrot.slane %v2536, 3
      %v2617 = vsel %vm2600, %v2616, %v2615
      %v2618 = vrot.slane %v2537, 2
      %v2619 = vsel %vm2603, %v2618, %v2617
      %v2620 = vrot.slane %v2538, 1
      %v2621 = vsel %vm2606, %v2620, %v2619
      %v2622 = vrot.slane %v2540, 7
      %v2623 = vsel %vm2588, %v2622, %v2539
      %v2624 = vrot.slane %v2541, 6
      %v2625 = vsel %vm2591, %v2624, %v2623
      %v2626 = vrot.slane %v2542, 5
      %v2627 = vsel %vm2594, %v2626, %v2625
      %v2628 = vrot.slane %v2543, 4
      %v2629 = vsel %vm2597, %v2628, %v2627
      %v2630 = vrot.slane %v2544, 3
      %v2631 = vsel %vm2600, %v2630, %v2629
      %v2632 = vrot.slane %v2545, 2
      %v2633 = vsel %vm2603, %v2632, %v2631
      %v2634 = vrot.slane %v2546, 1
      %v2635 = vsel %vm2606, %v2634, %v2633
      %v2636 = vrot.slane %v2548, 7
      %v2637 = vsel %vm2588, %v2636, %v2547
      %v2638 = vrot.slane %v2549, 6
      %v2639 = vsel %vm2591, %v2638, %v2637
      %v2640 = vrot.slane %v2550, 5
      %v2641 = vsel %vm2594, %v2640, %v2639
      %v2642 = vrot.slane %v2551, 4
      %v2643 = vsel %vm2597, %v2642, %v2641
      %v2644 = vrot.slane %v2552, 3
      %v2645 = vsel %vm2600, %v2644, %v2643
      %v2646 = vrot.slane %v2553, 2
      %v2647 = vsel %vm2603, %v2646, %v2645
      %v2648 = vrot.slane %v2554, 1
      %v2649 = vsel %vm2606, %v2648, %v2647
      %v2650 = vrot.slane %v2556, 7
      %v2651 = vsel %vm2588, %v2650, %v2555
      %v2652 = vrot.slane %v2557, 6
      %v2653 = vsel %vm2591, %v2652, %v2651
      %v2654 = vrot.slane %v2558, 5
      %v2655 = vsel %vm2594, %v2654, %v2653
      %v2656 = vrot.slane %v2559, 4
      %v2657 = vsel %vm2597, %v2656, %v2655
      %v2658 = vrot.slane %v2560, 3
      %v2659 = vsel %vm2600, %v2658, %v2657
      %v2660 = vrot.slane %v2561, 2
      %v2661 = vsel %vm2603, %v2660, %v2659
      %v2662 = vrot.slane %v2562, 1
      %v2663 = vsel %vm2606, %v2662, %v2661
      %v2664 = vrot.slane %v2564, 7
      %v2665 = vsel %vm2588, %v2664, %v2563
      %v2666 = vrot.slane %v2565, 6
      %v2667 = vsel %vm2591, %v2666, %v2665
      %v2668 = vrot.slane %v2566, 5
      %v2669 = vsel %vm2594, %v2668, %v2667
      %v2670 = vrot.slane %v2567, 4
      %v2671 = vsel %vm2597, %v2670, %v2669
      %v2672 = vrot.slane %v2568, 3
      %v2673 = vsel %vm2600, %v2672, %v2671
      %v2674 = vrot.slane %v2569, 2
      %v2675 = vsel %vm2603, %v2674, %v2673
      %v2676 = vrot.slane %v2570, 1
      %v2677 = vsel %vm2606, %v2676, %v2675
      %v2678 = vrot.slane %v2572, 7
      %v2679 = vsel %vm2588, %v2678, %v2571
      %v2680 = vrot.slane %v2573, 6
      %v2681 = vsel %vm2591, %v2680, %v2679
      %v2682 = vrot.slane %v2574, 5
      %v2683 = vsel %vm2594, %v2682, %v2681
      %v2684 = vrot.slane %v2575, 4
      %v2685 = vsel %vm2597, %v2684, %v2683
      %v2686 = vrot.slane %v2576, 3
      %v2687 = vsel %vm2600, %v2686, %v2685
      %v2688 = vrot.slane %v2577, 2
      %v2689 = vsel %vm2603, %v2688, %v2687
      %v2690 = vrot.slane %v2578, 1
      %v2691 = vsel %vm2606, %v2690, %v2689
      %v2692 = vrot.slane %v2580, 7
      %v2693 = vsel %vm2588, %v2692, %v2579
      %v2694 = vrot.slane %v2581, 6
      %v2695 = vsel %vm2591, %v2694, %v2693
      %v2696 = vrot.slane %v2582, 5
      %v2697 = vsel %vm2594, %v2696, %v2695
      %v2698 = vrot.slane %v2583, 4
      %v2699 = vsel %vm2597, %v2698, %v2697
      %v2700 = vrot.slane %v2584, 3
      %v2701 = vsel %vm2600, %v2700, %v2699
      %v2702 = vrot.slane %v2585, 2
      %v2703 = vsel %vm2603, %v2702, %v2701
      %v2704 = vrot.slane %v2586, 1
      %v2705 = vsel %vm2606, %v2704, %v2703
      %v2706 = vpack.c.b16 %v2607, %v2607
      %v2707 = vpack.c.b16 %v2621, %v2621
      %v2708 = vpack.c.b16 %v2635, %v2635
      %v2709 = vpack.c.b16 %v2649, %v2649
      %v2710 = vpack.c.b16 %v2663, %v2663
      %v2711 = vpack.c.b16 %v2677, %v2677
      %v2712 = vpack.c.b16 %v2691, %v2691
      %v2713 = vpack.c.b16 %v2705, %v2705
      %vm2722 = vcmask 125952
      %2723 = vst.msk [vmem:[%s269] sm:$0xf] %vm2722, %v2706
      %2724 = vst.msk [vmem:[%s269 + $0x4] sm:$0xf] %vm2722, %v2707
      %2725 = vst.msk [vmem:[%s269 + $0x8] sm:$0xf] %vm2722, %v2708
      %2726 = vst.msk [vmem:[%s269 + $0xc] sm:$0xf] %vm2722, %v2709
      %2727 = vst.msk [vmem:[%s269 + $0x10] sm:$0xf] %vm2722, %v2710
      %2728 = vst.msk [vmem:[%s269 + $0x14] sm:$0xf] %vm2722, %v2711
      %2729 = vst.msk [vmem:[%s269 + $0x18] sm:$0xf] %vm2722, %v2712
      %2730 = vst.msk [vmem:[%s269 + $0x1c] sm:$0xf] %vm2722, %v2713
      %p2731 = scmp.lt.s32.totalorder %s21, 1
      %s2732 = scalar_select %p2731, %s21, 1
      %p2733 = scmp.lt.s32.totalorder %s20, 0
      %s2734 = scalar_select %p2733, %s20, 0
      %s2735 = smul.addr %s2732, 32
      %s2736 = sadd.s32 %s2734, %s2735
      %s2737 = smul.addr %s2736, 8
      %s2738 = scalar_lea.vmem %s3, %s2737
      %p2739 = scmp.lt.s32.totalorder %s21, 1
      %s2740 = scalar_select %p2739, %s21, 1
      %p2741 = scmp.lt.s32.totalorder %s20, 0
      %s2742 = scalar_select %p2741, %s20, 0
      %s2743 = smul.addr %s2740, 8
      %s2744 = sadd.s32 %s2742, %s2743
      %s2745 = smul.addr %s2744, 4
      %s2746 = scalar_lea.vmem %s4, %s2745
      // Predicated region
      $region33: #{tpu_custom_call.1} parent=31 // pred_check
        %p2747 = pneg %p126
      $region34: #{tpu_custom_call.1} parent=31 // pred_check_branch
        %2749 = sbr.rel (%p2747) target = $region36
      $region35: #{tpu_custom_call.1} parent=31 // pred_region
        _
      $region36: #{tpu_custom_call.1} parent=31 // pred_fallthru
        _
      // Predicated region
      $region37: #{tpu_custom_call.1} parent=31 // pred_check
        %p2750 = pneg %p154
      $region38: #{tpu_custom_call.1} parent=31 // pred_check_branch
        %2752 = sbr.rel (%p2750) target = $region40
      $region39: #{tpu_custom_call.1} parent=31 // pred_region
        _
      $region40: #{tpu_custom_call.1} parent=31 // pred_fallthru
        _
    $region32: #{tpu_custom_call.1} parent=5 // pred_fallthru
      _
    %p2753 = scmp.le.s32.totalorder 2, %s11
    // Predicated region
    $region41: #{tpu_custom_call.1} parent=5 // pred_check
      %p2754 = pneg %p2753
    $region42: #{tpu_custom_call.1} parent=5 // pred_check_branch
      %2756 = sbr.rel (%p2754) target = $region44
    $region43: #{tpu_custom_call.1} parent=5 // pred_region
      %s2757 = ssub.s32 %s11, 2
      // Predicated region
      $region45: #{tpu_custom_call.1} parent=43 // pred_check
        %p2758 = pneg %p132
      $region46: #{tpu_custom_call.1} parent=43 // pred_check_branch
        %2760 = sbr.rel (%p2758) target = $region48
      $region47: #{tpu_custom_call.1} parent=43 // pred_region
        %p2761 = scmp.lt.s32.totalorder %s23, 1
        %s2762 = scalar_select %p2761, %s23, 1
        %p2763 = scmp.lt.s32.totalorder %s22, 0
        %s2764 = scalar_select %p2763, %s22, 0
        %s2765 = smul.addr %s2762, 32
        %s2766 = sadd.s32 %s2764, %s2765
        %s2767 = smul.addr %s2766, 8
        %s2768 = scalar_lea.vmem %s3, %s2767
      $region48: #{tpu_custom_call.1} parent=43 // pred_fallthru
        _
      // Predicated region
      $region49: #{tpu_custom_call.1} parent=43 // pred_check
        %p2769 = pneg %p160
      $region50: #{tpu_custom_call.1} parent=43 // pred_check_branch
        %2771 = sbr.rel (%p2769) target = $region52
      $region51: #{tpu_custom_call.1} parent=43 // pred_region
        %p2772 = scmp.lt.s32.totalorder %s23, 1
        %s2773 = scalar_select %p2772, %s23, 1
        %p2774 = scmp.lt.s32.totalorder %s22, 0
        %s2775 = scalar_select %p2774, %s22, 0
        %s2776 = smul.addr %s2773, 8
        %s2777 = sadd.s32 %s2775, %s2776
        %s2778 = smul.addr %s2777, 4
        %s2779 = scalar_lea.vmem %s4, %s2778
      $region52: #{tpu_custom_call.1} parent=43 // pred_fallthru
        _
    $region44: #{tpu_custom_call.1} parent=5 // pred_fallthru
      _
  $region6: #{tpu_custom_call.1} parent=0 // loop_footer
    %s15 = sadd.s32 1, %s11
  $region7: #{tpu_custom_call.1} parent=0 // loop_footer_branch
    %10 = sbr.rel target = $region3
  $region8: #{tpu_custom_call.1} parent=0 // loop_exit
    _

</llo_original>
